<compile_context>
chip_gen: v7x
topology: tpu7x:2x2x1
jax: 0.10.0
libtpu: 0.0.40
codegen_flags: <defaults>
</compile_context>

<pallas_src>
import functools

import jax
import jax.numpy as jnp
from jax.experimental import pallas as pl
from jax.experimental.pallas import tpu as pltpu


def _round_up(x, m):
    return ((x + m - 1) // m) * m


def _dwblock_kernel(xpad_hbm, wdw_ref, bdw_ref, wpw_ref, bpw_ref, out_ref,
                    band_ref, dma_sem, *, res_scale: float):
    """One grid step = one row-band of one image.

    xpad_hbm : (N, Hr+2p, Wp, Cp) zero-padded input, left in HBM (pl.ANY)
    wdw_ref  : (K, K, Cp)   depthwise weights (VMEM)
    bdw_ref  : (1, Cp)      depthwise bias
    wpw_ref  : (Cp, Cp)     pointwise weights, laid out (C_in, C_out)
    bpw_ref  : (1, Cp)      pointwise bias (res_scale pre-folded when >= 0)
    out_ref  : (1, TH, W, Cp) output block
    band_ref : (2, TH+2p, Wp, Cp) VMEM double buffer for the input row band
    dma_sem  : (2,) DMA semaphores
    """
    n = pl.program_id(0)
    h = pl.program_id(1)
    nh = pl.num_programs(1)

    _, TH, W, Cp = out_ref.shape
    K = wdw_ref.shape[0]
    THp = band_ref.shape[1]            # TH + 2 * (K // 2)

    def start_fetch(h_idx, slot):
        pltpu.make_async_copy(
            xpad_hbm.at[n, pl.ds(h_idx * TH, THp)],
            band_ref.at[slot],
            dma_sem.at[slot]).start()

    # Prime the pipeline at the first row-tile of every image (safe under a
    # megacore split of the batch axis, since every image starts at h == 0).
    @pl.when(h == 0)
    def _():
        start_fetch(0, 0)

    slot = h % 2
    # Wait for the band belonging to this step (descriptor only needs shapes).
    pltpu.make_async_copy(
        xpad_hbm.at[n, pl.ds(0, THp)],
        band_ref.at[slot],
        dma_sem.at[slot]).wait()

    # Prefetch the next band of this image while computing the current one.
    @pl.when(h + 1 < nh)
    def _():
        start_fetch(h + 1, 1 - slot)

    xband = band_ref.at[slot]          # (THp, Wp, Cp) ref view

    # ---- depthwise KxK conv: unrolled shift-MAC on the VPU, fp32 accumulate.
    # Accumulator is initialized with the depthwise bias (one fewer full-array
    # add). Each tap is read directly from the ref with static offsets.
    acc = jnp.broadcast_to(bdw_ref[0].astype(jnp.float32), (TH, W, Cp))
    for dy in range(K):
        for dx in range(K):
            tap = xband[pl.ds(dy, TH), pl.ds(dx, W), :].astype(jnp.float32)
            acc = acc + tap * wdw_ref[dy, dx, :].astype(jnp.float32)
    acc = jnp.maximum(acc, 0.0)                                        # ReLU

    # ---- pointwise 1x1 conv: (TH*W, Cp) @ (Cp, Cp) on the MXU.
    # TODO(synk): on v6e/v7x, bf16 operands here (fp32 accumulate) would double
    # MXU throughput and halve HBM traffic; kept fp32 to match the fp32 module.
    y = jnp.dot(acc.reshape(TH * W, Cp), wpw_ref[...].astype(jnp.float32),
                preferred_element_type=jnp.float32)
    y = jnp.maximum(y + bpw_ref[0].astype(jnp.float32), 0.0)           # ReLU
    if res_scale != 1.0:
        # Only taken for negative res_scale (positive scales are folded into
        # the pointwise weights/bias in the wrapper).
        y = y * jnp.float32(res_scale)

    out_ref[0] = y.reshape(TH, W, Cp).astype(out_ref.dtype)


def dwblock_forward(x_nchw, w_dw, b_dw, w_pw, b_pw, *, res_scale=1.0,
                    tile_h=None):
    """x_nchw: (N, C, H, W). w_dw: (K, K, C), b_dw: (C,),
    w_pw: (C_in, C_out), b_pw: (C,)."""
    N, C, H, W = x_nchw.shape
    K = w_dw.shape[0]
    assert K % 2 == 1, "DWBlock kernel assumes odd kernel_size ('same' output)"
    p = K // 2

    LANE = 128
    Cp = _round_up(C, LANE)            # lane-dense channel axis
    Wp = W + 2 * p
    itemsize = jnp.dtype(x_nchw.dtype).itemsize

    # ---- fold res_scale into the pointwise conv when it commutes with ReLU.
    scale = float(res_scale)
    if scale >= 0.0 and scale != 1.0:
        w_pw = w_pw * jnp.asarray(scale, w_pw.dtype)
        b_pw = b_pw * jnp.asarray(scale, b_pw.dtype)
        kernel_scale = 1.0
    elif scale >= 0.0:
        kernel_scale = 1.0
    else:
        kernel_scale = scale           # negative: apply in-kernel after ReLU

    # ---- pick a row-tile height from a VMEM budget (v7x-safe). ----
    if tile_h is None:
        # per output row: 2x input-band row + 2x output row + fp32 acc row
        per_row = ((2 * _round_up(Wp, 8) + 2 * _round_up(W, 8)) * Cp * itemsize
                   + _round_up(W, 8) * Cp * 4)
        tile_h = max(8, ((24 * 2**20) // max(per_row, 1)) // 8 * 8)
    tile_h = max(8, (int(tile_h) // 8) * 8)
    tile_h = min(tile_h, _round_up(H, 8))
    Hr = _round_up(H, tile_h)
    num_h = Hr // tile_h
    THp = tile_h + 2 * p

    # ---- glue: NCHW -> NHWC, zero 'same' halo + channel lane padding ----
    # (single fused pad; for repeated calls this layout conversion could be
    # hoisted out of the per-call path).
    x_nhwc = jnp.transpose(x_nchw, (0, 2, 3, 1))
    xpad = jnp.pad(x_nhwc, ((0, 0), (p, p + Hr - H), (p, p), (0, Cp - C)))

    wdw = jnp.pad(w_dw, ((0, 0), (0, 0), (0, Cp - C)))
    bdw = jnp.pad(b_dw, (0, Cp - C)).reshape(1, Cp)
    wpw = jnp.pad(w_pw, ((0, Cp - C), (0, Cp - C)))
    bpw = jnp.pad(b_pw, (0, Cp - C)).reshape(1, Cp)

    # ---- explicit VMEM budget (double-buffered band + out block + weights) ----
    band_bytes = 2 * THp * _round_up(Wp, 8) * Cp * itemsize
    out_bytes = 2 * tile_h * _round_up(W, 8) * Cp * itemsize
    wgt_bytes = (K * K * Cp + Cp * Cp + 2 * Cp) * itemsize * 2
    acc_bytes = 2 * tile_h * _round_up(W, 8) * Cp * 4
    vmem_limit = int(min(max(2 * (band_bytes + out_bytes + wgt_bytes + acc_bytes),
                             16 * 2**20), 48 * 2**20))

    # ---- advisory cost estimate for XLA scheduling around the custom call ----
    flops = int(N * Hr * W * Cp * (2 * K * K + 2 * Cp))
    bytes_accessed = int(
        N * (Hr + 2 * p) * Wp * Cp * itemsize          # padded input
        + N * Hr * W * Cp * itemsize                   # output
        + (K * K * Cp + Cp * Cp + 2 * Cp) * itemsize)  # weights/biases
    cost = pl.CostEstimate(flops=flops, transcendentals=0,
                           bytes_accessed=bytes_accessed)

    kernel = functools.partial(_dwblock_kernel, res_scale=float(kernel_scale))

    out_nhwc = pl.pallas_call(
        kernel,
        out_shape=jax.ShapeDtypeStruct((N, Hr, W, Cp), x_nchw.dtype),
        grid_spec=pltpu.PrefetchScalarGridSpec(
            num_scalar_prefetch=0,
            grid=(N, num_h),
            in_specs=[
                pl.BlockSpec(memory_space=pl.ANY),                  # x stays in HBM
                pl.BlockSpec((K, K, Cp), lambda n, h: (0, 0, 0)),
                pl.BlockSpec((1, Cp), lambda n, h: (0, 0)),
                pl.BlockSpec((Cp, Cp), lambda n, h: (0, 0)),
                pl.BlockSpec((1, Cp), lambda n, h: (0, 0)),
            ],
            out_specs=pl.BlockSpec((1, tile_h, W, Cp),
                                   lambda n, h: (n, h, 0, 0)),
            scratch_shapes=[
                pltpu.VMEM((2, THp, Wp, Cp), x_nchw.dtype),
                pltpu.SemaphoreType.DMA((2,)),
            ]),
        compiler_params=pltpu.CompilerParams(
            # Batch axis is independent ("parallel" -> megacore shard across
            # images); the row-tile axis stays "arbitrary" so each image's DMA
            # prime/prefetch sequence runs in order on one core.
            dimension_semantics=("parallel", "arbitrary"),
            vmem_limit_bytes=vmem_limit),
        cost_estimate=cost,
    )(xpad, wdw, bdw, wpw, bpw)

    # Drop padded rows / channels, back to PyTorch NCHW convention.
    return jnp.transpose(out_nhwc[:, :H, :, :C], (0, 3, 1, 2))


def _reference_forward(x_nchw, w_dw, b_dw, w_pw, b_pw, *, res_scale=1.0):
    """Pure-JAX reference (lax convs) mirroring nn.Conv2d semantics."""
    N, C, H, W = x_nchw.shape
    K = w_dw.shape[0]
    p = K // 2
    # depthwise weights OIHW with groups=C: (C, 1, K, K)
    w_dw_oihw = jnp.transpose(w_dw, (2, 0, 1))[:, None, :, :]
    y = jax.lax.conv_general_dilated(
        x_nchw, w_dw_oihw, (1, 1), [(p, p), (p, p)],
        dimension_numbers=("NCHW", "OIHW", "NCHW"), feature_group_count=C)
    y = jnp.maximum(y + b_dw.reshape(1, C, 1, 1), 0.0)
    # pointwise weights OIHW: (C_out, C_in, 1, 1)
    w_pw_oihw = jnp.transpose(w_pw, (1, 0))[:, :, None, None]
    y = jax.lax.conv_general_dilated(
        y, w_pw_oihw, (1, 1), [(0, 0), (0, 0)],
        dimension_numbers=("NCHW", "OIHW", "NCHW"))
    y = jnp.maximum(y + b_pw.reshape(1, C, 1, 1), 0.0) * res_scale
    return y


if __name__ == "__main__":
    # Small shapes consistent with the module: in_channels == out_channels.
    N, C, H, W, K = 2, 4, 16, 16, 3
    res_scale = 1.0

    key = jax.random.PRNGKey(0)
    kx, kw1, kb1, kw2, kb2 = jax.random.split(key, 5)

    x = jax.random.normal(kx, (N, C, H, W), jnp.float32)
    # depthwise conv params: (K, K, C) weights + (C,) bias
    w_dw = jax.random.normal(kw1, (K, K, C), jnp.float32) * 0.2
    b_dw = jax.random.normal(kb1, (C,), jnp.float32) * 0.1
    # pointwise 1x1 conv params: (C_in, C_out) weights + (C,) bias
    w_pw = jax.random.normal(kw2, (C, C), jnp.float32) * 0.2
    b_pw = jax.random.normal(kb2, (C,), jnp.float32) * 0.1

    # tile_h=8 -> grid (N, 2): exercises the halo DMA / row-tiling path.
    out = dwblock_forward(x, w_dw, b_dw, w_pw, b_pw,
                          res_scale=res_scale, tile_h=8)
    out = jax.block_until_ready(out)

    ref = _reference_forward(x, w_dw, b_dw, w_pw, b_pw, res_scale=res_scale)
    assert out.shape == (N, C, H, W)
    assert jnp.allclose(out, ref, atol=1e-4, rtol=1e-4), \
        float(jnp.max(jnp.abs(out - ref)))

    print("KERNEL_OK")
</pallas_src>

<mosaic_0001>
module attributes {stable_mosaic.version = 11 : i64} {
  func.func @_dwblock_kernel(%arg0: i32, %arg1: i32, %arg2: memref<2x18x18x128xf32, #tpu.memory_space<any>>, %arg3: memref<3x3x128xf32, #tpu.memory_space<vmem>>, %arg4: memref<1x128xf32, #tpu.memory_space<vmem>>, %arg5: memref<128x128xf32, #tpu.memory_space<vmem>>, %arg6: memref<1x128xf32, #tpu.memory_space<vmem>>, %arg7: memref<1x8x16x128xf32, #tpu.memory_space<vmem>>, %arg8: memref<2x10x18x128xf32, #tpu.memory_space<vmem>>, %arg9: memref<2x!tpu.dma_semaphore, #tpu.memory_space<semaphore_mem>>) attributes {dimension_semantics = [#tpu.dimension_semantics<parallel>, #tpu.dimension_semantics<arbitrary>], iteration_bounds = array<i64: 2, 2>, scalar_prefetch = 0 : i64, scratch_operands = 2 : i64, tpu.core_type = #tpu.core_type<tc>, window_params = [{}, {pipeline_mode = #tpu.pipeline_mode<synchronous>, transform_indices = @transform_1, window_bounds = array<i64: 3, 3, 128>}, {pipeline_mode = #tpu.pipeline_mode<synchronous>, transform_indices = @transform_2, window_bounds = array<i64: 1, 128>}, {pipeline_mode = #tpu.pipeline_mode<synchronous>, transform_indices = @transform_3, window_bounds = array<i64: 128, 128>}, {pipeline_mode = #tpu.pipeline_mode<synchronous>, transform_indices = @transform_4, window_bounds = array<i64: 1, 128>}, {transform_indices = @transform_5, window_bounds = array<i64: 1, 8, 16, 128>}]} {
    %c0_i32 = arith.constant 0 : i32
    %0 = arith.cmpi eq, %arg1, %c0_i32 : i32
    %1 = arith.extui %0 : i1 to i32
    %c0_i32_0 = arith.constant 0 : i32
    %2 = arith.cmpi ne, %1, %c0_i32_0 : i32
    scf.if %2 {
      %c0_i32_104 = arith.constant 0 : i32
      %c0_i32_105 = arith.constant 0 : i32
      %c0_i32_106 = arith.constant 0 : i32
      %c0_i32_107 = arith.constant 0 : i32
      %c0_i32_108 = arith.constant 0 : i32
      %124 = tpu.memref_slice %arg2[%arg0, %c0_i32_106, %c0_i32_107, %c0_i32_108] : memref<2x18x18x128xf32, #tpu.memory_space<any>> -> memref<1x10x18x128xf32, #tpu.memory_space<any>>
      %125 = tpu.memref_squeeze %124 : memref<1x10x18x128xf32, #tpu.memory_space<any>> -> memref<10x18x128xf32, #tpu.memory_space<any>>
      %c0_i32_109 = arith.constant 0 : i32
      %c0_i32_110 = arith.constant 0 : i32
      %c0_i32_111 = arith.constant 0 : i32
      %126 = tpu.memref_slice %arg8[%c0_i32_104, %c0_i32_109, %c0_i32_110, %c0_i32_111] : memref<2x10x18x128xf32, #tpu.memory_space<vmem>> -> memref<1x10x18x128xf32, #tpu.memory_space<vmem>>
      %127 = tpu.memref_squeeze %126 : memref<1x10x18x128xf32, #tpu.memory_space<vmem>> -> memref<10x18x128xf32, #tpu.memory_space<vmem>>
      %128 = tpu.memref_slice %arg9[%c0_i32_105] : memref<2x!tpu.dma_semaphore, #tpu.memory_space<semaphore_mem>> -> memref<1x!tpu.dma_semaphore, #tpu.memory_space<semaphore_mem>>
      %129 = tpu.memref_squeeze %128 : memref<1x!tpu.dma_semaphore, #tpu.memory_space<semaphore_mem>> -> memref<!tpu.dma_semaphore, #tpu.memory_space<semaphore_mem>>
      tpu.enqueue_dma source(%125 : memref<10x18x128xf32, #tpu.memory_space<any>>) target(%127 : memref<10x18x128xf32, #tpu.memory_space<vmem>>) target_semaphore(%129 : memref<!tpu.dma_semaphore, #tpu.memory_space<semaphore_mem>>)
    } else {
    }
    %c2_i32 = arith.constant 2 : i32
    %c0_i32_1 = arith.constant 0 : i32
    %3 = arith.cmpi eq, %c2_i32, %c0_i32_1 : i32
    %c1_i32 = arith.constant 1 : i32
    %4 = arith.select %3, %c1_i32, %c2_i32 : i32
    %5 = arith.remsi %arg1, %4 : i32
    %c0_i32_2 = arith.constant 0 : i32
    %6 = arith.cmpi ne, %5, %c0_i32_2 : i32
    %c0_i32_3 = arith.constant 0 : i32
    %7 = arith.cmpi slt, %5, %c0_i32_3 : i32
    %c0_i32_4 = arith.constant 0 : i32
    %8 = arith.cmpi slt, %4, %c0_i32_4 : i32
    %9 = arith.xori %7, %8 : i1
    %10 = arith.andi %9, %6 : i1
    %11 = arith.addi %5, %4 : i32
    %12 = arith.select %10, %11, %5 : i32
    %c0_i32_5 = arith.constant 0 : i32
    %c0_i32_6 = arith.constant 0 : i32
    %c0_i32_7 = arith.constant 0 : i32
    %13 = tpu.memref_slice %arg2[%arg0, %c0_i32_5, %c0_i32_6, %c0_i32_7] : memref<2x18x18x128xf32, #tpu.memory_space<any>> -> memref<1x10x18x128xf32, #tpu.memory_space<any>>
    %14 = tpu.memref_squeeze %13 : memref<1x10x18x128xf32, #tpu.memory_space<any>> -> memref<10x18x128xf32, #tpu.memory_space<any>>
    %c0_i32_8 = arith.constant 0 : i32
    %c0_i32_9 = arith.constant 0 : i32
    %c0_i32_10 = arith.constant 0 : i32
    %15 = tpu.memref_slice %arg8[%12, %c0_i32_8, %c0_i32_9, %c0_i32_10] : memref<2x10x18x128xf32, #tpu.memory_space<vmem>> -> memref<1x10x18x128xf32, #tpu.memory_space<vmem>>
    %16 = tpu.memref_squeeze %15 : memref<1x10x18x128xf32, #tpu.memory_space<vmem>> -> memref<10x18x128xf32, #tpu.memory_space<vmem>>
    %17 = tpu.memref_slice %arg9[%12] : memref<2x!tpu.dma_semaphore, #tpu.memory_space<semaphore_mem>> -> memref<1x!tpu.dma_semaphore, #tpu.memory_space<semaphore_mem>>
    %18 = tpu.memref_squeeze %17 : memref<1x!tpu.dma_semaphore, #tpu.memory_space<semaphore_mem>> -> memref<!tpu.dma_semaphore, #tpu.memory_space<semaphore_mem>>
    tpu.wait_dma2 semaphore(%18 : memref<!tpu.dma_semaphore, #tpu.memory_space<semaphore_mem>>) src(%14 : memref<10x18x128xf32, #tpu.memory_space<any>>) dst(%16 : memref<10x18x128xf32, #tpu.memory_space<vmem>>)
    %c1_i32_11 = arith.constant 1 : i32
    %19 = arith.addi %arg1, %c1_i32_11 : i32
    %c2_i32_12 = arith.constant 2 : i32
    %20 = arith.cmpi slt, %19, %c2_i32_12 : i32
    %21 = arith.extui %20 : i1 to i32
    %c0_i32_13 = arith.constant 0 : i32
    %22 = arith.cmpi ne, %21, %c0_i32_13 : i32
    scf.if %22 {
      %c1_i32_104 = arith.constant 1 : i32
      %124 = arith.addi %arg1, %c1_i32_104 : i32
      %c1_i32_105 = arith.constant 1 : i32
      %125 = arith.subi %c1_i32_105, %12 : i32
      %c8_i32 = arith.constant 8 : i32
      %126 = arith.muli %124, %c8_i32 : i32
      %c0_i32_106 = arith.constant 0 : i32
      %c0_i32_107 = arith.constant 0 : i32
      %127 = tpu.memref_slice %arg2[%arg0, %126, %c0_i32_106, %c0_i32_107] : memref<2x18x18x128xf32, #tpu.memory_space<any>> -> memref<1x10x18x128xf32, #tpu.memory_space<any>>
      %128 = tpu.memref_squeeze %127 : memref<1x10x18x128xf32, #tpu.memory_space<any>> -> memref<10x18x128xf32, #tpu.memory_space<any>>
      %c0_i32_108 = arith.constant 0 : i32
      %c0_i32_109 = arith.constant 0 : i32
      %c0_i32_110 = arith.constant 0 : i32
      %129 = tpu.memref_slice %arg8[%125, %c0_i32_108, %c0_i32_109, %c0_i32_110] : memref<2x10x18x128xf32, #tpu.memory_space<vmem>> -> memref<1x10x18x128xf32, #tpu.memory_space<vmem>>
      %130 = tpu.memref_squeeze %129 : memref<1x10x18x128xf32, #tpu.memory_space<vmem>> -> memref<10x18x128xf32, #tpu.memory_space<vmem>>
      %131 = tpu.memref_slice %arg9[%125] : memref<2x!tpu.dma_semaphore, #tpu.memory_space<semaphore_mem>> -> memref<1x!tpu.dma_semaphore, #tpu.memory_space<semaphore_mem>>
      %132 = tpu.memref_squeeze %131 : memref<1x!tpu.dma_semaphore, #tpu.memory_space<semaphore_mem>> -> memref<!tpu.dma_semaphore, #tpu.memory_space<semaphore_mem>>
      tpu.enqueue_dma source(%128 : memref<10x18x128xf32, #tpu.memory_space<any>>) target(%130 : memref<10x18x128xf32, #tpu.memory_space<vmem>>) target_semaphore(%132 : memref<!tpu.dma_semaphore, #tpu.memory_space<semaphore_mem>>)
    } else {
    }
    %c0 = arith.constant 0 : index
    %c0_14 = arith.constant 0 : index
    %23 = vector.load %arg4[%c0, %c0_14] : memref<1x128xf32, #tpu.memory_space<vmem>>, vector<1x128xf32>
    %24 = vector.shape_cast %23 : vector<1x128xf32> to vector<128xf32>
    %25 = vector.shape_cast %24 : vector<128xf32> to vector<1x1x128xf32>
    %26 = vector.broadcast %25 : vector<1x1x128xf32> to vector<8x16x128xf32>
    %c0_i32_15 = arith.constant 0 : i32
    %c0_i32_16 = arith.constant 0 : i32
    %c0_i32_17 = arith.constant 0 : i32
    %27 = tpu.memref_slice %arg8[%12, %c0_i32_15, %c0_i32_16, %c0_i32_17] : memref<2x10x18x128xf32, #tpu.memory_space<vmem>> -> memref<1x10x18x128xf32, #tpu.memory_space<vmem>>
    %28 = tpu.memref_squeeze %27 : memref<1x10x18x128xf32, #tpu.memory_space<vmem>> -> memref<10x18x128xf32, #tpu.memory_space<vmem>>
    %c0_18 = arith.constant 0 : index
    %c0_19 = arith.constant 0 : index
    %c0_20 = arith.constant 0 : index
    %29 = vector.load %28[%c0_18, %c0_19, %c0_20] : memref<10x18x128xf32, #tpu.memory_space<vmem>>, vector<8x16x128xf32>
    %c0_21 = arith.constant 0 : index
    %c0_22 = arith.constant 0 : index
    %c0_23 = arith.constant 0 : index
    %30 = vector.load %arg3[%c0_21, %c0_22, %c0_23] : memref<3x3x128xf32, #tpu.memory_space<vmem>>, vector<1x1x128xf32>
    %31 = vector.shape_cast %30 : vector<1x1x128xf32> to vector<128xf32>
    %32 = vector.shape_cast %31 : vector<128xf32> to vector<1x1x128xf32>
    %33 = vector.broadcast %32 : vector<1x1x128xf32> to vector<8x16x128xf32>
    %34 = arith.mulf %29, %33 : vector<8x16x128xf32>
    %35 = arith.addf %26, %34 : vector<8x16x128xf32>
    %c0_i32_24 = arith.constant 0 : i32
    %c0_i32_25 = arith.constant 0 : i32
    %c0_i32_26 = arith.constant 0 : i32
    %36 = tpu.memref_slice %arg8[%12, %c0_i32_24, %c0_i32_25, %c0_i32_26] : memref<2x10x18x128xf32, #tpu.memory_space<vmem>> -> memref<1x10x18x128xf32, #tpu.memory_space<vmem>>
    %37 = tpu.memref_squeeze %36 : memref<1x10x18x128xf32, #tpu.memory_space<vmem>> -> memref<10x18x128xf32, #tpu.memory_space<vmem>>
    %c0_27 = arith.constant 0 : index
    %c1 = arith.constant 1 : index
    %c0_28 = arith.constant 0 : index
    %38 = vector.load %37[%c0_27, %c1, %c0_28] : memref<10x18x128xf32, #tpu.memory_space<vmem>>, vector<8x16x128xf32>
    %c0_29 = arith.constant 0 : index
    %c1_30 = arith.constant 1 : index
    %c0_31 = arith.constant 0 : index
    %39 = vector.load %arg3[%c0_29, %c1_30, %c0_31] : memref<3x3x128xf32, #tpu.memory_space<vmem>>, vector<1x1x128xf32>
    %40 = vector.shape_cast %39 : vector<1x1x128xf32> to vector<128xf32>
    %41 = vector.shape_cast %40 : vector<128xf32> to vector<1x1x128xf32>
    %42 = vector.broadcast %41 : vector<1x1x128xf32> to vector<8x16x128xf32>
    %43 = arith.mulf %38, %42 : vector<8x16x128xf32>
    %44 = arith.addf %35, %43 : vector<8x16x128xf32>
    %c0_i32_32 = arith.constant 0 : i32
    %c0_i32_33 = arith.constant 0 : i32
    %c0_i32_34 = arith.constant 0 : i32
    %45 = tpu.memref_slice %arg8[%12, %c0_i32_32, %c0_i32_33, %c0_i32_34] : memref<2x10x18x128xf32, #tpu.memory_space<vmem>> -> memref<1x10x18x128xf32, #tpu.memory_space<vmem>>
    %46 = tpu.memref_squeeze %45 : memref<1x10x18x128xf32, #tpu.memory_space<vmem>> -> memref<10x18x128xf32, #tpu.memory_space<vmem>>
    %c0_35 = arith.constant 0 : index
    %c2 = arith.constant 2 : index
    %c0_36 = arith.constant 0 : index
    %47 = vector.load %46[%c0_35, %c2, %c0_36] : memref<10x18x128xf32, #tpu.memory_space<vmem>>, vector<8x16x128xf32>
    %c0_37 = arith.constant 0 : index
    %c2_38 = arith.constant 2 : index
    %c0_39 = arith.constant 0 : index
    %48 = vector.load %arg3[%c0_37, %c2_38, %c0_39] : memref<3x3x128xf32, #tpu.memory_space<vmem>>, vector<1x1x128xf32>
    %49 = vector.shape_cast %48 : vector<1x1x128xf32> to vector<128xf32>
    %50 = vector.shape_cast %49 : vector<128xf32> to vector<1x1x128xf32>
    %51 = vector.broadcast %50 : vector<1x1x128xf32> to vector<8x16x128xf32>
    %52 = arith.mulf %47, %51 : vector<8x16x128xf32>
    %53 = arith.addf %44, %52 : vector<8x16x128xf32>
    %c0_i32_40 = arith.constant 0 : i32
    %c0_i32_41 = arith.constant 0 : i32
    %c0_i32_42 = arith.constant 0 : i32
    %54 = tpu.memref_slice %arg8[%12, %c0_i32_40, %c0_i32_41, %c0_i32_42] : memref<2x10x18x128xf32, #tpu.memory_space<vmem>> -> memref<1x10x18x128xf32, #tpu.memory_space<vmem>>
    %55 = tpu.memref_squeeze %54 : memref<1x10x18x128xf32, #tpu.memory_space<vmem>> -> memref<10x18x128xf32, #tpu.memory_space<vmem>>
    %c1_43 = arith.constant 1 : index
    %c0_44 = arith.constant 0 : index
    %c0_45 = arith.constant 0 : index
    %56 = vector.load %55[%c1_43, %c0_44, %c0_45] : memref<10x18x128xf32, #tpu.memory_space<vmem>>, vector<8x16x128xf32>
    %c1_46 = arith.constant 1 : index
    %c0_47 = arith.constant 0 : index
    %c0_48 = arith.constant 0 : index
    %57 = vector.load %arg3[%c1_46, %c0_47, %c0_48] : memref<3x3x128xf32, #tpu.memory_space<vmem>>, vector<1x1x128xf32>
    %58 = vector.shape_cast %57 : vector<1x1x128xf32> to vector<128xf32>
    %59 = vector.shape_cast %58 : vector<128xf32> to vector<1x1x128xf32>
    %60 = vector.broadcast %59 : vector<1x1x128xf32> to vector<8x16x128xf32>
    %61 = arith.mulf %56, %60 : vector<8x16x128xf32>
    %62 = arith.addf %53, %61 : vector<8x16x128xf32>
    %c0_i32_49 = arith.constant 0 : i32
    %c0_i32_50 = arith.constant 0 : i32
    %c0_i32_51 = arith.constant 0 : i32
    %63 = tpu.memref_slice %arg8[%12, %c0_i32_49, %c0_i32_50, %c0_i32_51] : memref<2x10x18x128xf32, #tpu.memory_space<vmem>> -> memref<1x10x18x128xf32, #tpu.memory_space<vmem>>
    %64 = tpu.memref_squeeze %63 : memref<1x10x18x128xf32, #tpu.memory_space<vmem>> -> memref<10x18x128xf32, #tpu.memory_space<vmem>>
    %c1_52 = arith.constant 1 : index
    %c1_53 = arith.constant 1 : index
    %c0_54 = arith.constant 0 : index
    %65 = vector.load %64[%c1_52, %c1_53, %c0_54] : memref<10x18x128xf32, #tpu.memory_space<vmem>>, vector<8x16x128xf32>
    %c1_55 = arith.constant 1 : index
    %c1_56 = arith.constant 1 : index
    %c0_57 = arith.constant 0 : index
    %66 = vector.load %arg3[%c1_55, %c1_56, %c0_57] : memref<3x3x128xf32, #tpu.memory_space<vmem>>, vector<1x1x128xf32>
    %67 = vector.shape_cast %66 : vector<1x1x128xf32> to vector<128xf32>
    %68 = vector.shape_cast %67 : vector<128xf32> to vector<1x1x128xf32>
    %69 = vector.broadcast %68 : vector<1x1x128xf32> to vector<8x16x128xf32>
    %70 = arith.mulf %65, %69 : vector<8x16x128xf32>
    %71 = arith.addf %62, %70 : vector<8x16x128xf32>
    %c0_i32_58 = arith.constant 0 : i32
    %c0_i32_59 = arith.constant 0 : i32
    %c0_i32_60 = arith.constant 0 : i32
    %72 = tpu.memref_slice %arg8[%12, %c0_i32_58, %c0_i32_59, %c0_i32_60] : memref<2x10x18x128xf32, #tpu.memory_space<vmem>> -> memref<1x10x18x128xf32, #tpu.memory_space<vmem>>
    %73 = tpu.memref_squeeze %72 : memref<1x10x18x128xf32, #tpu.memory_space<vmem>> -> memref<10x18x128xf32, #tpu.memory_space<vmem>>
    %c1_61 = arith.constant 1 : index
    %c2_62 = arith.constant 2 : index
    %c0_63 = arith.constant 0 : index
    %74 = vector.load %73[%c1_61, %c2_62, %c0_63] : memref<10x18x128xf32, #tpu.memory_space<vmem>>, vector<8x16x128xf32>
    %c1_64 = arith.constant 1 : index
    %c2_65 = arith.constant 2 : index
    %c0_66 = arith.constant 0 : index
    %75 = vector.load %arg3[%c1_64, %c2_65, %c0_66] : memref<3x3x128xf32, #tpu.memory_space<vmem>>, vector<1x1x128xf32>
    %76 = vector.shape_cast %75 : vector<1x1x128xf32> to vector<128xf32>
    %77 = vector.shape_cast %76 : vector<128xf32> to vector<1x1x128xf32>
    %78 = vector.broadcast %77 : vector<1x1x128xf32> to vector<8x16x128xf32>
    %79 = arith.mulf %74, %78 : vector<8x16x128xf32>
    %80 = arith.addf %71, %79 : vector<8x16x128xf32>
    %c0_i32_67 = arith.constant 0 : i32
    %c0_i32_68 = arith.constant 0 : i32
    %c0_i32_69 = arith.constant 0 : i32
    %81 = tpu.memref_slice %arg8[%12, %c0_i32_67, %c0_i32_68, %c0_i32_69] : memref<2x10x18x128xf32, #tpu.memory_space<vmem>> -> memref<1x10x18x128xf32, #tpu.memory_space<vmem>>
    %82 = tpu.memref_squeeze %81 : memref<1x10x18x128xf32, #tpu.memory_space<vmem>> -> memref<10x18x128xf32, #tpu.memory_space<vmem>>
    %c2_70 = arith.constant 2 : index
    %c0_71 = arith.constant 0 : index
    %c0_72 = arith.constant 0 : index
    %83 = vector.load %82[%c2_70, %c0_71, %c0_72] : memref<10x18x128xf32, #tpu.memory_space<vmem>>, vector<8x16x128xf32>
    %c2_73 = arith.constant 2 : index
    %c0_74 = arith.constant 0 : index
    %c0_75 = arith.constant 0 : index
    %84 = vector.load %arg3[%c2_73, %c0_74, %c0_75] : memref<3x3x128xf32, #tpu.memory_space<vmem>>, vector<1x1x128xf32>
    %85 = vector.shape_cast %84 : vector<1x1x128xf32> to vector<128xf32>
    %86 = vector.shape_cast %85 : vector<128xf32> to vector<1x1x128xf32>
    %87 = vector.broadcast %86 : vector<1x1x128xf32> to vector<8x16x128xf32>
    %88 = arith.mulf %83, %87 : vector<8x16x128xf32>
    %89 = arith.addf %80, %88 : vector<8x16x128xf32>
    %c0_i32_76 = arith.constant 0 : i32
    %c0_i32_77 = arith.constant 0 : i32
    %c0_i32_78 = arith.constant 0 : i32
    %90 = tpu.memref_slice %arg8[%12, %c0_i32_76, %c0_i32_77, %c0_i32_78] : memref<2x10x18x128xf32, #tpu.memory_space<vmem>> -> memref<1x10x18x128xf32, #tpu.memory_space<vmem>>
    %91 = tpu.memref_squeeze %90 : memref<1x10x18x128xf32, #tpu.memory_space<vmem>> -> memref<10x18x128xf32, #tpu.memory_space<vmem>>
    %c2_79 = arith.constant 2 : index
    %c1_80 = arith.constant 1 : index
    %c0_81 = arith.constant 0 : index
    %92 = vector.load %91[%c2_79, %c1_80, %c0_81] : memref<10x18x128xf32, #tpu.memory_space<vmem>>, vector<8x16x128xf32>
    %c2_82 = arith.constant 2 : index
    %c1_83 = arith.constant 1 : index
    %c0_84 = arith.constant 0 : index
    %93 = vector.load %arg3[%c2_82, %c1_83, %c0_84] : memref<3x3x128xf32, #tpu.memory_space<vmem>>, vector<1x1x128xf32>
    %94 = vector.shape_cast %93 : vector<1x1x128xf32> to vector<128xf32>
    %95 = vector.shape_cast %94 : vector<128xf32> to vector<1x1x128xf32>
    %96 = vector.broadcast %95 : vector<1x1x128xf32> to vector<8x16x128xf32>
    %97 = arith.mulf %92, %96 : vector<8x16x128xf32>
    %98 = arith.addf %89, %97 : vector<8x16x128xf32>
    %c0_i32_85 = arith.constant 0 : i32
    %c0_i32_86 = arith.constant 0 : i32
    %c0_i32_87 = arith.constant 0 : i32
    %99 = tpu.memref_slice %arg8[%12, %c0_i32_85, %c0_i32_86, %c0_i32_87] : memref<2x10x18x128xf32, #tpu.memory_space<vmem>> -> memref<1x10x18x128xf32, #tpu.memory_space<vmem>>
    %100 = tpu.memref_squeeze %99 : memref<1x10x18x128xf32, #tpu.memory_space<vmem>> -> memref<10x18x128xf32, #tpu.memory_space<vmem>>
    %c2_88 = arith.constant 2 : index
    %c2_89 = arith.constant 2 : index
    %c0_90 = arith.constant 0 : index
    %101 = vector.load %100[%c2_88, %c2_89, %c0_90] : memref<10x18x128xf32, #tpu.memory_space<vmem>>, vector<8x16x128xf32>
    %c2_91 = arith.constant 2 : index
    %c2_92 = arith.constant 2 : index
    %c0_93 = arith.constant 0 : index
    %102 = vector.load %arg3[%c2_91, %c2_92, %c0_93] : memref<3x3x128xf32, #tpu.memory_space<vmem>>, vector<1x1x128xf32>
    %103 = vector.shape_cast %102 : vector<1x1x128xf32> to vector<128xf32>
    %104 = vector.shape_cast %103 : vector<128xf32> to vector<1x1x128xf32>
    %105 = vector.broadcast %104 : vector<1x1x128xf32> to vector<8x16x128xf32>
    %106 = arith.mulf %101, %105 : vector<8x16x128xf32>
    %107 = arith.addf %98, %106 : vector<8x16x128xf32>
    %cst = arith.constant 0.000000e+00 : f32
    %108 = vector.broadcast %cst : f32 to vector<8x16x128xf32>
    %109 = arith.maximumf %107, %108 : vector<8x16x128xf32>
    %110 = vector.shape_cast %109 : vector<8x16x128xf32> to vector<128x128xf32>
    %c0_94 = arith.constant 0 : index
    %c0_95 = arith.constant 0 : index
    %111 = vector.load %arg5[%c0_94, %c0_95] : memref<128x128xf32, #tpu.memory_space<vmem>>, vector<128x128xf32>
    %cst_96 = arith.constant dense<0.000000e+00> : vector<128x128xf32>
    %112 = tpu.matmul %110, %111, %cst_96 {dimension_numbers = #tpu.dot_dimension_numbers<[1], [0], [0], [1], [0, 0, 1, 1], [], []>} : vector<128x128xf32>, vector<128x128xf32>, vector<128x128xf32> -> vector<128x128xf32>
    %c0_97 = arith.constant 0 : index
    %c0_98 = arith.constant 0 : index
    %113 = vector.load %arg6[%c0_97, %c0_98] : memref<1x128xf32, #tpu.memory_space<vmem>>, vector<1x128xf32>
    %114 = vector.shape_cast %113 : vector<1x128xf32> to vector<128xf32>
    %115 = vector.shape_cast %114 : vector<128xf32> to vector<1x128xf32>
    %116 = vector.broadcast %115 : vector<1x128xf32> to vector<128x128xf32>
    %117 = arith.addf %112, %116 : vector<128x128xf32>
    %cst_99 = arith.constant 0.000000e+00 : f32
    %118 = vector.broadcast %cst_99 : f32 to vector<128x128xf32>
    %119 = arith.maximumf %117, %118 : vector<128x128xf32>
    %120 = vector.shape_cast %119 : vector<128x128xf32> to vector<8x16x128xf32>
    %c0_100 = arith.constant 0 : index
    %c0_101 = arith.constant 0 : index
    %c0_102 = arith.constant 0 : index
    %c0_103 = arith.constant 0 : index
    %121 = vector.load %arg7[%c0_100, %c0_101, %c0_102, %c0_103] : memref<1x8x16x128xf32, #tpu.memory_space<vmem>>, vector<1x8x16x128xf32>
    %122 = vector.shape_cast %121 : vector<1x8x16x128xf32> to vector<8x16x128xf32>
    %123 = vector.shape_cast %120 : vector<8x16x128xf32> to vector<1x8x16x128xf32>
    tpu.vector_store %arg7[%c0_100, %c0_101, %c0_102, %c0_103], %123 {strides = array<i32>} : memref<1x8x16x128xf32, #tpu.memory_space<vmem>>, vector<1x8x16x128xf32>,
    return
  }
  func.func @transform_1(%arg0: i32, %arg1: i32) -> (i32, i32, i32) {
    %c0_i32 = arith.constant 0 : i32
    %c0_i32_0 = arith.constant 0 : i32
    %c0_i32_1 = arith.constant 0 : i32
    %c0_i32_2 = arith.constant 0 : i32
    return %c0_i32, %c0_i32_0, %c0_i32_1 : i32, i32, i32
  }
  func.func @transform_2(%arg0: i32, %arg1: i32) -> (i32, i32) {
    %c0_i32 = arith.constant 0 : i32
    %c0_i32_0 = arith.constant 0 : i32
    %c0_i32_1 = arith.constant 0 : i32
    return %c0_i32, %c0_i32_0 : i32, i32
  }
  func.func @transform_3(%arg0: i32, %arg1: i32) -> (i32, i32) {
    %c0_i32 = arith.constant 0 : i32
    %c0_i32_0 = arith.constant 0 : i32
    %c0_i32_1 = arith.constant 0 : i32
    return %c0_i32, %c0_i32_0 : i32, i32
  }
  func.func @transform_4(%arg0: i32, %arg1: i32) -> (i32, i32) {
    %c0_i32 = arith.constant 0 : i32
    %c0_i32_0 = arith.constant 0 : i32
    %c0_i32_1 = arith.constant 0 : i32
    return %c0_i32, %c0_i32_0 : i32, i32
  }
  func.func @transform_5(%arg0: i32, %arg1: i32) -> (i32, i32, i32, i32) {
    %c0_i32 = arith.constant 0 : i32
    %c0_i32_0 = arith.constant 0 : i32
    %c0_i32_1 = arith.constant 0 : i32
    return %arg0, %arg1, %c0_i32, %c0_i32_0 : i32, i32, i32, i32
  }
}

</mosaic_0001>

<llo_original>
// kernel: tpu_custom_call.1
$region0: #{tpu_custom_call.1}
  #allocation0 [shape = 'u32[]', space=smem, size = 0x4, offset = 0x4, fixed_abs, tag = 'smem constant byte address 0x4 - core index']
  #allocation1 [shape = 'u32[144,128]{1,0:T(1,128)}', space=vmem, size = 0x12000, scoped, tag = 'internal scratch']
  #allocation2 [shape = 'f32[2,10,18,128]{3,2,1,0:T(8,128)}', space=vmem, size = 0x3c000, scoped, tag = 'scratch operand']
  #allocation3 [shape = 's32[2]{0}', space=sflag, size = 0x8, scoped, tag = 'scratch operand']
  #allocation6 [shape = 's32[]', space=sflag, size = 0x4, offset = 0, fixed_abs, tag = 'sflag constant byte address 0x0 - dummy sync flag']
  #allocation7 [shape = 's32[]', space=sflag, size = 0x4, offset = 0, fixed_abs, tag = 'sflag constant byte address 0x0 - dummy sync flag']
  %s0 = inlined_call_operand.vmem [shape: f32[2,18,18,128], index: 0, kind: input, shape index: {}]
  %s1 = inlined_call_operand.vmem [shape: f32[3,3,128], index: 1, kind: input, shape index: {}]
  %s2 = inlined_call_operand.vmem [shape: f32[1,128], index: 2, kind: input, shape index: {}]
  %s3 = inlined_call_operand.vmem [shape: f32[128,128], index: 3, kind: input, shape index: {}]
  %s4 = inlined_call_operand.vmem [shape: f32[1,128], index: 4, kind: input, shape index: {}]
  %s5 = inlined_call_operand.hbm [shape: f32[2,16,16,128], index: 5, kind: output, shape index: {}]
  %s6 = sld [smem:[#allocation0]]
  $region131: #{tpu_custom_call.1} parent=0
    _
  %s8 = ssub.s32 1, %s6
  %s9 = scalar_select 0, %s8, %s6
  $region1: #{tpu_custom_call.1} parent=0
    #allocation4 [shape = 'u8[131072]{0}', space=vmem, size = 0x20000, scoped, tag = 'output window, operand 0']
    #allocation5 [shape = 's32[2]{0}', space=sflag, size = 0x8, scoped, tag = 'scoped memory for tpu_custom_call.1']
    %10 = vsyncpa [#allocation5], 0
    %s11 = scalar_lea.sflag [#allocation5], 1
    %12 = vsyncpa %s11, 0
    loop: start=0, step=1, limit=6
    $region2: #{tpu_custom_call.1} parent=1 // loop_pre_header
      _
    $region3: #{tpu_custom_call.1} parent=1 // loop_header
      %s14 = sphi 0, %s18
      %p15 = scmp.ge.s32.totalorder %s14, 6
      %s21 = sphi 0, %s33
      %s22 = sphi 0, %s29
      %s23 = sphi 0, %s21
      %s24 = sphi 0, %s22
      %s25 = sphi 0, %s23
      %s26 = sphi 0, %s24
      %s34 = sphi 0, %s34
      %s36 = sphi 0, %s34
      %s37 = sphi 0, %s36
      %s51 = sphi 0, %s37
      %s55 = sphi 0, %s55
      %s57 = sphi 0, %s55
      %s58 = sphi 0, %s57
      %s72 = sphi 0, %s58
      %s76 = sphi 0, %s76
      %s78 = sphi 0, %s76
      %s79 = sphi 0, %s78
      %s93 = sphi 0, %s79
      %s97 = sphi 0, %s97
      %s99 = sphi 0, %s97
      %s100 = sphi 0, %s99
      %s114 = sphi 0, %s100
      %s122 = sphi 0, %s124
      %s125 = sphi 0, %s122
      %s126 = sphi 0, %s125
      %s142 = sphi 0, %s126
    $region4: #{tpu_custom_call.1} parent=1 // loop_header_branch
      %17 = sbr.rel (%p15) target = $region8
    $region5: #{tpu_custom_call.1} parent=1 // loop_body
      %s19 = ssub.s32 %s14, 1
      %s20 = ssub.s32 %s14, 2
      %s27 = sadd.s32 1, %s22
      %p28 = scmp.ge.s32.totalorder %s27, 2
      %s29 = scalar_select %p28, 0, %s27
      %s30 = sadd.s32 1, %s21
      %s31 = scalar_select %p28, %s30, %s21
      %p32 = scmp.ge.s32.totalorder %s31, 2
      %s33 = scalar_select %p32, 0, %s31
      %s35 = sadd.s32 %s34, 1
      %p38 = scmp.eq.s32.totalorder %s14, 3
      %p39 = scmp.ne.s32.totalorder %s34, %s36
      %p40 = scmp.eq.s32.totalorder %s14, 0
      %p41 = por %p39, %p40
      %p42 = scmp.ne.s32.totalorder %s34, %s36
      %p43 = scmp.eq.s32.totalorder %s19, 3
      %p44 = por %p42, %p43
      %p45 = scmp.ne.s32.totalorder %s36, %s37
      %p46 = scmp.eq.s32.totalorder %s19, 0
      %p47 = por %p45, %p46
      %p48 = scmp.ne.s32.totalorder %s36, %s37
      %p49 = scmp.eq.s32.totalorder %s20, 3
      %p50 = por %p48, %p49
      %p52 = scmp.ne.s32.totalorder %s37, %s51
      %p53 = scmp.eq.s32.totalorder %s20, 0
      %p54 = por %p52, %p53
      %s56 = sadd.s32 %s55, 1
      %p59 = scmp.eq.s32.totalorder %s14, 3
      %p60 = scmp.ne.s32.totalorder %s55, %s57
      %p61 = scmp.eq.s32.totalorder %s14, 0
      %p62 = por %p60, %p61
      %p63 = scmp.ne.s32.totalorder %s55, %s57
      %p64 = scmp.eq.s32.totalorder %s19, 3
      %p65 = por %p63, %p64
      %p66 = scmp.ne.s32.totalorder %s57, %s58
      %p67 = scmp.eq.s32.totalorder %s19, 0
      %p68 = por %p66, %p67
      %p69 = scmp.ne.s32.totalorder %s57, %s58
      %p70 = scmp.eq.s32.totalorder %s20, 3
      %p71 = por %p69, %p70
      %p73 = scmp.ne.s32.totalorder %s58, %s72
      %p74 = scmp.eq.s32.totalorder %s20, 0
      %p75 = por %p73, %p74
      %s77 = sadd.s32 %s76, 1
      %p80 = scmp.eq.s32.totalorder %s14, 3
      %p81 = scmp.ne.s32.totalorder %s76, %s78
      %p82 = scmp.eq.s32.totalorder %s14, 0
      %p83 = por %p81, %p82
      %p84 = scmp.ne.s32.totalorder %s76, %s78
      %p85 = scmp.eq.s32.totalorder %s19, 3
      %p86 = por %p84, %p85
      %p87 = scmp.ne.s32.totalorder %s78, %s79
      %p88 = scmp.eq.s32.totalorder %s19, 0
      %p89 = por %p87, %p88
      %p90 = scmp.ne.s32.totalorder %s78, %s79
      %p91 = scmp.eq.s32.totalorder %s20, 3
      %p92 = por %p90, %p91
      %p94 = scmp.ne.s32.totalorder %s79, %s93
      %p95 = scmp.eq.s32.totalorder %s20, 0
      %p96 = por %p94, %p95
      %s98 = sadd.s32 %s97, 1
      %p101 = scmp.eq.s32.totalorder %s14, 3
      %p102 = scmp.ne.s32.totalorder %s97, %s99
      %p103 = scmp.eq.s32.totalorder %s14, 0
      %p104 = por %p102, %p103
      %p105 = scmp.ne.s32.totalorder %s97, %s99
      %p106 = scmp.eq.s32.totalorder %s19, 3
      %p107 = por %p105, %p106
      %p108 = scmp.ne.s32.totalorder %s99, %s100
      %p109 = scmp.eq.s32.totalorder %s19, 0
      %p110 = por %p108, %p109
      %p111 = scmp.ne.s32.totalorder %s99, %s100
      %p112 = scmp.eq.s32.totalorder %s20, 3
      %p113 = por %p111, %p112
      %p115 = scmp.ne.s32.totalorder %s100, %s114
      %p116 = scmp.eq.s32.totalorder %s20, 0
      %p117 = por %p115, %p116
      %s118 = ssub.s32 %s21, %s33
      %s119 = ssub.s32 %s22, %s29
      %s120 = sor.u32 %s118, %s119
      %p121 = scmp.eq.s32.totalorder %s120, 0
      %s123 = sadd.s32 %s122, 1
      %s124 = scalar_select %p121, %s122, %s123
      %p127 = pneg %p121
      %p128 = scmp.eq.s32.totalorder %s14, 3
      %p129 = por %p127, %p128
      %p130 = scmp.ne.s32.totalorder %s122, %s125
      %p131 = scmp.eq.s32.totalorder %s14, 0
      %p132 = por %p130, %p131
      %p133 = scmp.ne.s32.totalorder %s122, %s125
      %p134 = scmp.eq.s32.totalorder %s19, 3
      %p135 = por %p133, %p134
      %p136 = scmp.ne.s32.totalorder %s125, %s126
      %p137 = scmp.eq.s32.totalorder %s19, 0
      %p138 = por %p136, %p137
      %p139 = scmp.ne.s32.totalorder %s125, %s126
      %p140 = scmp.eq.s32.totalorder %s20, 3
      %p141 = por %p139, %p140
      %p143 = scmp.ne.s32.totalorder %s126, %s142
      %p144 = scmp.eq.s32.totalorder %s20, 0
      %p145 = por %p143, %p144
      %p146 = scmp.le.s32.totalorder 1, %s14
      %p147 = scmp.lt.s32.totalorder %s14, 5
      %p148 = pnand %p146, %p147
      %p149 = pneg %p148
      // Predicated region
      $region9: #{tpu_custom_call.1} parent=5 // pred_check
        _
      $region10: #{tpu_custom_call.1} parent=5 // pred_check_branch
        %151 = sbr.rel (%p148) target = $region12
      $region11: #{tpu_custom_call.1} parent=5 // pred_region
        %s152 = ssub.s32 %s14, 1
        // Predicated region
        $region13: #{tpu_custom_call.1} parent=11 // pred_check
          %p153 = pneg %p47
        $region14: #{tpu_custom_call.1} parent=11 // pred_check_branch
          %155 = sbr.rel (%p153) target = $region16
        $region15: #{tpu_custom_call.1} parent=11 // pred_region
          _
        $region16: #{tpu_custom_call.1} parent=11 // pred_fallthru
          _
        // Predicated region
        $region17: #{tpu_custom_call.1} parent=11 // pred_check
          %p156 = pneg %p68
        $region18: #{tpu_custom_call.1} parent=11 // pred_check_branch
          %158 = sbr.rel (%p156) target = $region20
        $region19: #{tpu_custom_call.1} parent=11 // pred_region
          _
        $region20: #{tpu_custom_call.1} parent=11 // pred_fallthru
          _
        // Predicated region
        $region21: #{tpu_custom_call.1} parent=11 // pred_check
          %p159 = pneg %p89
        $region22: #{tpu_custom_call.1} parent=11 // pred_check_branch
          %161 = sbr.rel (%p159) target = $region24
        $region23: #{tpu_custom_call.1} parent=11 // pred_region
          _
        $region24: #{tpu_custom_call.1} parent=11 // pred_fallthru
          _
        // Predicated region
        $region25: #{tpu_custom_call.1} parent=11 // pred_check
          %p162 = pneg %p110
        $region26: #{tpu_custom_call.1} parent=11 // pred_check_branch
          %164 = sbr.rel (%p162) target = $region28
        $region27: #{tpu_custom_call.1} parent=11 // pred_region
          _
        $region28: #{tpu_custom_call.1} parent=11 // pred_fallthru
          _
      $region12: #{tpu_custom_call.1} parent=5 // pred_fallthru
        _
      %p165 = scmp.lt.s32.totalorder %s14, 4
      // Predicated region
      $region29: #{tpu_custom_call.1} parent=5 // pred_check
        %p166 = pneg %p165
      $region30: #{tpu_custom_call.1} parent=5 // pred_check_branch
        %168 = sbr.rel (%p166) target = $region32
      $region31: #{tpu_custom_call.1} parent=5 // pred_region
        _
      $region32: #{tpu_custom_call.1} parent=5 // pred_fallthru
        _
      %p169 = scmp.le.s32.totalorder 1, %s14
      %p170 = scmp.lt.s32.totalorder %s14, 5
      %p171 = pnand %p169, %p170
      %p172 = pneg %p171
      // Predicated region
      $region33: #{tpu_custom_call.1} parent=5 // pred_check
        _
      $region34: #{tpu_custom_call.1} parent=5 // pred_check_branch
        %174 = sbr.rel (%p171) target = $region36
      $region35: #{tpu_custom_call.1} parent=5 // pred_region
        %s175 = ssub.s32 %s14, 1
        %p176 = pneg %p47
        %p177 = pneg %p44
        %p178 = pneg %p68
        %p179 = pneg %p65
        %p180 = pneg %p89
        %p181 = pneg %p86
        %p182 = pneg %p110
        %p183 = pneg %p107
        %p184 = pneg %p138
        %p185 = pneg %p135
        %s186 = sand.u32 %s125, 1
        %s187 = scalar_lea.sflag [#allocation5], %s186
        %s188 = sand.u32 %s125, 1
        %s189 = smul.addr %s188, 128
        %s190 = scalar_lea.vmem [#allocation4], %s189
        %s191 = smul.u32 8, %s24
        %p192 = scmp.eq.s32.totalorder %s24, 0
        // Predicated region
        $region37: #{tpu_custom_call.1} parent=35 // pred_check
          %p193 = pneg %p192
        $region38: #{tpu_custom_call.1} parent=35 // pred_check_branch
          %195 = sbr.rel (%p193) target = $region40
        $region39: #{tpu_custom_call.1} parent=35 // pred_region
          %s196 = smul.u32 %s23, 432
          %s197 = scalar_lea.vmem %s0, %s196
          %p199 = scmp.lt.u32.totalorder 18, 8
          %p200 = pneg %p199
          // Predicated region
          $region41: #{tpu_custom_call.1} parent=39 // pred_check
            _
          $region42: #{tpu_custom_call.1} parent=39 // pred_check_branch
            %202 = sbr.rel (%p199) target = $region44
          $region43: #{tpu_custom_call.1} parent=39 // pred_region
            %s235 = sand.u32 18, 7
            %p236 = scmp.eq.s32.totalorder %s235, 0
            %p237 = pneg %p236
            // Predicated region
            $region56: #{tpu_custom_call.1} parent=43 // pred_check
              _
            $region57: #{tpu_custom_call.1} parent=43 // pred_check_branch
              %239 = sbr.rel (%p236) target = $region59
            $region58: #{tpu_custom_call.1} parent=43 // pred_region
              %s240 = sand.u32 18, 7
              %s241 = ssub.s32 18, %s240
              %s242 = scalar_lea.vmem %s197, %s241
              %s243 = ssub.s32 18, %s240
              %s244 = scalar_lea.vmem [#allocation2], %s243
              loop: start=0, step=1, limit=1
              $region60: #{tpu_custom_call.1} parent=58 // loop_pre_header
                _
              $region61: #{tpu_custom_call.1} parent=58 // loop_header
                %s246 = sphi 0, %s250
                %p247 = scmp.ge.s32.totalorder %s246, 1
                %s251 = sphi %s197, %s197
                %s252 = sphi [#allocation2], [#allocation2]
              $region62: #{tpu_custom_call.1} parent=58 // loop_header_branch
                %249 = sbr.rel (%p247) target = $region66
              $region63: #{tpu_custom_call.1} parent=58 // loop_body
                %v253 = vld [vmem:[%s251] sm:$0xff]
                %254 = vst [vmem:[%s252] sm:$0xff] %v253
                %v255 = vld [vmem:[%s251 + $0x8] sm:$0xff]
                %256 = vst [vmem:[%s252 + $0x8] sm:$0xff] %v255
                %v257 = vld [vmem:[%s251 + $0x18] sm:$0xff]
                %258 = vst [vmem:[%s252 + $0x18] sm:$0xff] %v257
                %v259 = vld [vmem:[%s251 + $0x20] sm:$0xff]
                %260 = vst [vmem:[%s252 + $0x20] sm:$0xff] %v259
                %v261 = vld [vmem:[%s251 + $0x30] sm:$0xff]
                %262 = vst [vmem:[%s252 + $0x30] sm:$0xff] %v261
                %v263 = vld [vmem:[%s251 + $0x38] sm:$0xff]
                %264 = vst [vmem:[%s252 + $0x38] sm:$0xff] %v263
                %v265 = vld [vmem:[%s251 + $0x48] sm:$0xff]
                %266 = vst [vmem:[%s252 + $0x48] sm:$0xff] %v265
                %v267 = vld [vmem:[%s251 + $0x50] sm:$0xff]
                %268 = vst [vmem:[%s252 + $0x50] sm:$0xff] %v267
                %v269 = vld [vmem:[%s251 + $0x60] sm:$0xff]
                %270 = vst [vmem:[%s252 + $0x60] sm:$0xff] %v269
                %v271 = vld [vmem:[%s251 + $0x68] sm:$0xff]
                %272 = vst [vmem:[%s252 + $0x68] sm:$0xff] %v271
                %v273 = vld [vmem:[%s251 + $0x78] sm:$0xff]
                %274 = vst [vmem:[%s252 + $0x78] sm:$0xff] %v273
                %v275 = vld [vmem:[%s251 + $0x80] sm:$0xff]
                %276 = vst [vmem:[%s252 + $0x80] sm:$0xff] %v275
                %v277 = vld [vmem:[%s251 + $0x90] sm:$0xff]
                %278 = vst [vmem:[%s252 + $0x90] sm:$0xff] %v277
                %v279 = vld [vmem:[%s251 + $0x98] sm:$0xff]
                %280 = vst [vmem:[%s252 + $0x98] sm:$0xff] %v279
                %v281 = vld [vmem:[%s251 + $0xa8] sm:$0xff]
                %282 = vst [vmem:[%s252 + $0xa8] sm:$0xff] %v281
                %v283 = vld [vmem:[%s251 + $0xb0] sm:$0xff]
                %284 = vst [vmem:[%s252 + $0xb0] sm:$0xff] %v283
                %v285 = vld [vmem:[%s251 + $0xc0] sm:$0xff]
                %286 = vst [vmem:[%s252 + $0xc0] sm:$0xff] %v285
                %v287 = vld [vmem:[%s251 + $0xc8] sm:$0xff]
                %288 = vst [vmem:[%s252 + $0xc8] sm:$0xff] %v287
                %v289 = vld [vmem:[%s251 + $0xd8] sm:$0xff]
                %290 = vst [vmem:[%s252 + $0xd8] sm:$0xff] %v289
                %v291 = vld [vmem:[%s251 + $0xe0] sm:$0xff]
                %292 = vst [vmem:[%s252 + $0xe0] sm:$0xff] %v291
              $region64: #{tpu_custom_call.1} parent=58 // loop_footer
                %s250 = sadd.s32 1, %s246
              $region65: #{tpu_custom_call.1} parent=58 // loop_footer_branch
                %245 = sbr.rel target = $region61
              $region66: #{tpu_custom_call.1} parent=58 // loop_exit
                _
              %s293 = sshllo.u32 0, %s240
              loop: start=0, step=1, limit=1
              $region67: #{tpu_custom_call.1} parent=58 // loop_pre_header
                _
              $region68: #{tpu_custom_call.1} parent=58 // loop_header
                %s295 = sphi 0, %s299
                %p296 = scmp.ge.s32.totalorder %s295, 1
                %s300 = sphi %s242, %s242
                %s301 = sphi %s244, %s244
              $region69: #{tpu_custom_call.1} parent=58 // loop_header_branch
                %298 = sbr.rel (%p296) target = $region73
              $region70: #{tpu_custom_call.1} parent=58 // loop_body
                %v302 = vld [vmem:[%s300] sm:%s293]
                %303 = vst [vmem:[%s301] sm:%s293] %v302
                %v304 = vld [vmem:[%s300 + $0x18] sm:%s293]
                %305 = vst [vmem:[%s301 + $0x18] sm:%s293] %v304
                %v306 = vld [vmem:[%s300 + $0x30] sm:%s293]
                %307 = vst [vmem:[%s301 + $0x30] sm:%s293] %v306
                %v308 = vld [vmem:[%s300 + $0x48] sm:%s293]
                %309 = vst [vmem:[%s301 + $0x48] sm:%s293] %v308
                %v310 = vld [vmem:[%s300 + $0x60] sm:%s293]
                %311 = vst [vmem:[%s301 + $0x60] sm:%s293] %v310
                %v312 = vld [vmem:[%s300 + $0x78] sm:%s293]
                %313 = vst [vmem:[%s301 + $0x78] sm:%s293] %v312
                %v314 = vld [vmem:[%s300 + $0x90] sm:%s293]
                %315 = vst [vmem:[%s301 + $0x90] sm:%s293] %v314
                %v316 = vld [vmem:[%s300 + $0xa8] sm:%s293]
                %317 = vst [vmem:[%s301 + $0xa8] sm:%s293] %v316
                %v318 = vld [vmem:[%s300 + $0xc0] sm:%s293]
                %319 = vst [vmem:[%s301 + $0xc0] sm:%s293] %v318
                %v320 = vld [vmem:[%s300 + $0xd8] sm:%s293]
                %321 = vst [vmem:[%s301 + $0xd8] sm:%s293] %v320
              $region71: #{tpu_custom_call.1} parent=58 // loop_footer
                %s299 = sadd.s32 1, %s295
              $region72: #{tpu_custom_call.1} parent=58 // loop_footer_branch
                %294 = sbr.rel target = $region68
              $region73: #{tpu_custom_call.1} parent=58 // loop_exit
                _
            $region59: #{tpu_custom_call.1} parent=43 // pred_fallthru
              _
          $region44: #{tpu_custom_call.1} parent=39 // pred_fallthru
            _
          // Predicated region
          $region45: #{tpu_custom_call.1} parent=39 // pred_check
            %p203 = pneg %p199
          $region46: #{tpu_custom_call.1} parent=39 // pred_check_branch
            %205 = sbr.rel (%p203) target = $region48
          $region47: #{tpu_custom_call.1} parent=39 // pred_region
            %s206 = sshllo.u32 0, 18
            loop: start=0, step=1, limit=1
            $region49: #{tpu_custom_call.1} parent=47 // loop_pre_header
              _
            $region50: #{tpu_custom_call.1} parent=47 // loop_header
              %s208 = sphi 0, %s212
              %p209 = scmp.ge.s32.totalorder %s208, 1
              %s213 = sphi %s197, %s197
              %s214 = sphi [#allocation2], [#allocation2]
            $region51: #{tpu_custom_call.1} parent=47 // loop_header_branch
              %211 = sbr.rel (%p209) target = $region55
            $region52: #{tpu_custom_call.1} parent=47 // loop_body
              %v215 = vld [vmem:[%s213] sm:%s206]
              %216 = vst [vmem:[%s214] sm:%s206] %v215
              %v217 = vld [vmem:[%s213 + $0x18] sm:%s206]
              %218 = vst [vmem:[%s214 + $0x18] sm:%s206] %v217
              %v219 = vld [vmem:[%s213 + $0x30] sm:%s206]
              %220 = vst [vmem:[%s214 + $0x30] sm:%s206] %v219
              %v221 = vld [vmem:[%s213 + $0x48] sm:%s206]
              %222 = vst [vmem:[%s214 + $0x48] sm:%s206] %v221
              %v223 = vld [vmem:[%s213 + $0x60] sm:%s206]
              %224 = vst [vmem:[%s214 + $0x60] sm:%s206] %v223
              %v225 = vld [vmem:[%s213 + $0x78] sm:%s206]
              %226 = vst [vmem:[%s214 + $0x78] sm:%s206] %v225
              %v227 = vld [vmem:[%s213 + $0x90] sm:%s206]
              %228 = vst [vmem:[%s214 + $0x90] sm:%s206] %v227
              %v229 = vld [vmem:[%s213 + $0xa8] sm:%s206]
              %230 = vst [vmem:[%s214 + $0xa8] sm:%s206] %v229
              %v231 = vld [vmem:[%s213 + $0xc0] sm:%s206]
              %232 = vst [vmem:[%s214 + $0xc0] sm:%s206] %v231
              %v233 = vld [vmem:[%s213 + $0xd8] sm:%s206]
              %234 = vst [vmem:[%s214 + $0xd8] sm:%s206] %v233
            $region53: #{tpu_custom_call.1} parent=47 // loop_footer
              %s212 = sadd.s32 1, %s208
            $region54: #{tpu_custom_call.1} parent=47 // loop_footer_branch
              %207 = sbr.rel target = $region50
            $region55: #{tpu_custom_call.1} parent=47 // loop_exit
              _
          $region48: #{tpu_custom_call.1} parent=39 // pred_fallthru
            _
          // Predicated region
          $region74: #{tpu_custom_call.1} parent=39 // pred_check
            _
          $region75: #{tpu_custom_call.1} parent=39 // pred_check_branch
            %324 = sbr.rel (0) target = $region77
          $region76: #{tpu_custom_call.1} parent=39 // pred_region
            %325 = vsyncadd [#allocation3], 2880
          $region77: #{tpu_custom_call.1} parent=39 // pred_fallthru
            _
        $region40: #{tpu_custom_call.1} parent=35 // pred_fallthru
          _
        %p326 = scmp.lt.s32.totalorder %s24, 0
        %s327 = ssub.s32 0, %s24
        %s328 = scalar_select %p326, %s327, %s24
        %s329 = sand.u32 %s328, 1
        %s330 = ssub.s32 0, %s329
        %s331 = scalar_select %p326, %s330, %s329
        %p332 = scmp.ne.s32.totalorder %s331, 0
        %p333 = scmp.lt.s32.totalorder %s331, 0
        %p334 = pnand %p333, %p332
        %p335 = pneg %p334
        %s336 = sadd.s32 %s331, 2
        %s337 = scalar_select %p335, %s336, %s331
        %s338 = smul.u32 %s337, 240
        %s339 = scalar_lea.vmem [#allocation2], %s338
        %s340 = scalar_lea.sflag [#allocation3], %s337
        %s341 = smul.u32 10, 18
        %s342 = smul.u32 %s341, 1
        %s343 = sshll.u32 %s342, 4
        %344 = dma.done %s340, %s343
        %s345 = sadd.s32 %s24, 1
        %p346 = scmp.lt.s32.totalorder %s345, 2
        // Predicated region
        $region78: #{tpu_custom_call.1} parent=35 // pred_check
          %p347 = pneg %p346
        $region79: #{tpu_custom_call.1} parent=35 // pred_check_branch
          %349 = sbr.rel (%p347) target = $region81
        $region80: #{tpu_custom_call.1} parent=35 // pred_region
          %s350 = ssub.s32 1, %s337
          %s351 = smul.u32 %s345, 8
          %s352 = smul.u32 %s351, 24
          %s353 = smul.u32 %s23, 432
          %s354 = sadd.s32 %s352, %s353
          %s355 = scalar_lea.vmem %s0, %s354
          %s356 = smul.u32 %s350, 240
          %s357 = scalar_lea.vmem [#allocation2], %s356
          %s358 = scalar_lea.sflag [#allocation3], %s350
          %p360 = scmp.lt.u32.totalorder 18, 8
          %p361 = pneg %p360
          // Predicated region
          $region82: #{tpu_custom_call.1} parent=80 // pred_check
            _
          $region83: #{tpu_custom_call.1} parent=80 // pred_check_branch
            %363 = sbr.rel (%p360) target = $region85
          $region84: #{tpu_custom_call.1} parent=80 // pred_region
            %s396 = sand.u32 18, 7
            %p397 = scmp.eq.s32.totalorder %s396, 0
            %p398 = pneg %p397
            // Predicated region
            $region97: #{tpu_custom_call.1} parent=84 // pred_check
              _
            $region98: #{tpu_custom_call.1} parent=84 // pred_check_branch
              %400 = sbr.rel (%p397) target = $region100
            $region99: #{tpu_custom_call.1} parent=84 // pred_region
              %s401 = sand.u32 18, 7
              %s402 = ssub.s32 18, %s401
              %s403 = scalar_lea.vmem %s355, %s402
              %s404 = ssub.s32 18, %s401
              %s405 = scalar_lea.vmem %s357, %s404 [#allocation2]
              loop: start=0, step=1, limit=1
              $region101: #{tpu_custom_call.1} parent=99 // loop_pre_header
                _
              $region102: #{tpu_custom_call.1} parent=99 // loop_header
                %s407 = sphi 0, %s411
                %p408 = scmp.ge.s32.totalorder %s407, 1
                %s412 = sphi %s355, %s355
                %s413 = sphi %s357, %s357
              $region103: #{tpu_custom_call.1} parent=99 // loop_header_branch
                %410 = sbr.rel (%p408) target = $region107
              $region104: #{tpu_custom_call.1} parent=99 // loop_body
                %v414 = vld [vmem:[%s412] sm:$0xff]
                %415 = vst [vmem:[%s413] sm:$0xff] %v414
                %v416 = vld [vmem:[%s412 + $0x8] sm:$0xff]
                %417 = vst [vmem:[%s413 + $0x8] sm:$0xff] %v416
                %v418 = vld [vmem:[%s412 + $0x18] sm:$0xff]
                %419 = vst [vmem:[%s413 + $0x18] sm:$0xff] %v418
                %v420 = vld [vmem:[%s412 + $0x20] sm:$0xff]
                %421 = vst [vmem:[%s413 + $0x20] sm:$0xff] %v420
                %v422 = vld [vmem:[%s412 + $0x30] sm:$0xff]
                %423 = vst [vmem:[%s413 + $0x30] sm:$0xff] %v422
                %v424 = vld [vmem:[%s412 + $0x38] sm:$0xff]
                %425 = vst [vmem:[%s413 + $0x38] sm:$0xff] %v424
                %v426 = vld [vmem:[%s412 + $0x48] sm:$0xff]
                %427 = vst [vmem:[%s413 + $0x48] sm:$0xff] %v426
                %v428 = vld [vmem:[%s412 + $0x50] sm:$0xff]
                %429 = vst [vmem:[%s413 + $0x50] sm:$0xff] %v428
                %v430 = vld [vmem:[%s412 + $0x60] sm:$0xff]
                %431 = vst [vmem:[%s413 + $0x60] sm:$0xff] %v430
                %v432 = vld [vmem:[%s412 + $0x68] sm:$0xff]
                %433 = vst [vmem:[%s413 + $0x68] sm:$0xff] %v432
                %v434 = vld [vmem:[%s412 + $0x78] sm:$0xff]
                %435 = vst [vmem:[%s413 + $0x78] sm:$0xff] %v434
                %v436 = vld [vmem:[%s412 + $0x80] sm:$0xff]
                %437 = vst [vmem:[%s413 + $0x80] sm:$0xff] %v436
                %v438 = vld [vmem:[%s412 + $0x90] sm:$0xff]
                %439 = vst [vmem:[%s413 + $0x90] sm:$0xff] %v438
                %v440 = vld [vmem:[%s412 + $0x98] sm:$0xff]
                %441 = vst [vmem:[%s413 + $0x98] sm:$0xff] %v440
                %v442 = vld [vmem:[%s412 + $0xa8] sm:$0xff]
                %443 = vst [vmem:[%s413 + $0xa8] sm:$0xff] %v442
                %v444 = vld [vmem:[%s412 + $0xb0] sm:$0xff]
                %445 = vst [vmem:[%s413 + $0xb0] sm:$0xff] %v444
                %v446 = vld [vmem:[%s412 + $0xc0] sm:$0xff]
                %447 = vst [vmem:[%s413 + $0xc0] sm:$0xff] %v446
                %v448 = vld [vmem:[%s412 + $0xc8] sm:$0xff]
                %449 = vst [vmem:[%s413 + $0xc8] sm:$0xff] %v448
                %v450 = vld [vmem:[%s412 + $0xd8] sm:$0xff]
                %451 = vst [vmem:[%s413 + $0xd8] sm:$0xff] %v450
                %v452 = vld [vmem:[%s412 + $0xe0] sm:$0xff]
                %453 = vst [vmem:[%s413 + $0xe0] sm:$0xff] %v452
              $region105: #{tpu_custom_call.1} parent=99 // loop_footer
                %s411 = sadd.s32 1, %s407
              $region106: #{tpu_custom_call.1} parent=99 // loop_footer_branch
                %406 = sbr.rel target = $region102
              $region107: #{tpu_custom_call.1} parent=99 // loop_exit
                _
              %s454 = sshllo.u32 0, %s401
              loop: start=0, step=1, limit=1
              $region108: #{tpu_custom_call.1} parent=99 // loop_pre_header
                _
              $region109: #{tpu_custom_call.1} parent=99 // loop_header
                %s456 = sphi 0, %s460
                %p457 = scmp.ge.s32.totalorder %s456, 1
                %s461 = sphi %s403, %s403
                %s462 = sphi %s405, %s405
              $region110: #{tpu_custom_call.1} parent=99 // loop_header_branch
                %459 = sbr.rel (%p457) target = $region114
              $region111: #{tpu_custom_call.1} parent=99 // loop_body
                %v463 = vld [vmem:[%s461] sm:%s454]
                %464 = vst [vmem:[%s462] sm:%s454] %v463
                %v465 = vld [vmem:[%s461 + $0x18] sm:%s454]
                %466 = vst [vmem:[%s462 + $0x18] sm:%s454] %v465
                %v467 = vld [vmem:[%s461 + $0x30] sm:%s454]
                %468 = vst [vmem:[%s462 + $0x30] sm:%s454] %v467
                %v469 = vld [vmem:[%s461 + $0x48] sm:%s454]
                %470 = vst [vmem:[%s462 + $0x48] sm:%s454] %v469
                %v471 = vld [vmem:[%s461 + $0x60] sm:%s454]
                %472 = vst [vmem:[%s462 + $0x60] sm:%s454] %v471
                %v473 = vld [vmem:[%s461 + $0x78] sm:%s454]
                %474 = vst [vmem:[%s462 + $0x78] sm:%s454] %v473
                %v475 = vld [vmem:[%s461 + $0x90] sm:%s454]
                %476 = vst [vmem:[%s462 + $0x90] sm:%s454] %v475
                %v477 = vld [vmem:[%s461 + $0xa8] sm:%s454]
                %478 = vst [vmem:[%s462 + $0xa8] sm:%s454] %v477
                %v479 = vld [vmem:[%s461 + $0xc0] sm:%s454]
                %480 = vst [vmem:[%s462 + $0xc0] sm:%s454] %v479
                %v481 = vld [vmem:[%s461 + $0xd8] sm:%s454]
                %482 = vst [vmem:[%s462 + $0xd8] sm:%s454] %v481
              $region112: #{tpu_custom_call.1} parent=99 // loop_footer
                %s460 = sadd.s32 1, %s456
              $region113: #{tpu_custom_call.1} parent=99 // loop_footer_branch
                %455 = sbr.rel target = $region109
              $region114: #{tpu_custom_call.1} parent=99 // loop_exit
                _
            $region100: #{tpu_custom_call.1} parent=84 // pred_fallthru
              _
          $region85: #{tpu_custom_call.1} parent=80 // pred_fallthru
            _
          // Predicated region
          $region86: #{tpu_custom_call.1} parent=80 // pred_check
            %p364 = pneg %p360
          $region87: #{tpu_custom_call.1} parent=80 // pred_check_branch
            %366 = sbr.rel (%p364) target = $region89
          $region88: #{tpu_custom_call.1} parent=80 // pred_region
            %s367 = sshllo.u32 0, 18
            loop: start=0, step=1, limit=1
            $region90: #{tpu_custom_call.1} parent=88 // loop_pre_header
              _
            $region91: #{tpu_custom_call.1} parent=88 // loop_header
              %s369 = sphi 0, %s373
              %p370 = scmp.ge.s32.totalorder %s369, 1
              %s374 = sphi %s355, %s355
              %s375 = sphi %s357, %s357
            $region92: #{tpu_custom_call.1} parent=88 // loop_header_branch
              %372 = sbr.rel (%p370) target = $region96
            $region93: #{tpu_custom_call.1} parent=88 // loop_body
              %v376 = vld [vmem:[%s374] sm:%s367]
              %377 = vst [vmem:[%s375] sm:%s367] %v376
              %v378 = vld [vmem:[%s374 + $0x18] sm:%s367]
              %379 = vst [vmem:[%s375 + $0x18] sm:%s367] %v378
              %v380 = vld [vmem:[%s374 + $0x30] sm:%s367]
              %381 = vst [vmem:[%s375 + $0x30] sm:%s367] %v380
              %v382 = vld [vmem:[%s374 + $0x48] sm:%s367]
              %383 = vst [vmem:[%s375 + $0x48] sm:%s367] %v382
              %v384 = vld [vmem:[%s374 + $0x60] sm:%s367]
              %385 = vst [vmem:[%s375 + $0x60] sm:%s367] %v384
              %v386 = vld [vmem:[%s374 + $0x78] sm:%s367]
              %387 = vst [vmem:[%s375 + $0x78] sm:%s367] %v386
              %v388 = vld [vmem:[%s374 + $0x90] sm:%s367]
              %389 = vst [vmem:[%s375 + $0x90] sm:%s367] %v388
              %v390 = vld [vmem:[%s374 + $0xa8] sm:%s367]
              %391 = vst [vmem:[%s375 + $0xa8] sm:%s367] %v390
              %v392 = vld [vmem:[%s374 + $0xc0] sm:%s367]
              %393 = vst [vmem:[%s375 + $0xc0] sm:%s367] %v392
              %v394 = vld [vmem:[%s374 + $0xd8] sm:%s367]
              %395 = vst [vmem:[%s375 + $0xd8] sm:%s367] %v394
            $region94: #{tpu_custom_call.1} parent=88 // loop_footer
              %s373 = sadd.s32 1, %s369
            $region95: #{tpu_custom_call.1} parent=88 // loop_footer_branch
              %368 = sbr.rel target = $region91
            $region96: #{tpu_custom_call.1} parent=88 // loop_exit
              _
          $region89: #{tpu_custom_call.1} parent=80 // pred_fallthru
            _
          // Predicated region
          $region115: #{tpu_custom_call.1} parent=80 // pred_check
            _
          $region116: #{tpu_custom_call.1} parent=80 // pred_check_branch
            %485 = sbr.rel (0) target = $region118
          $region117: #{tpu_custom_call.1} parent=80 // pred_region
            %486 = vsyncadd %s358, 2880
          $region118: #{tpu_custom_call.1} parent=80 // pred_fallthru
            _
        $region81: #{tpu_custom_call.1} parent=35 // pred_fallthru
          _
        %v487 = vld [vmem:[%s2] sm:$0x1]
        %v489 = vlaneseq
        %v490 = vshrl.u32 %v489, 7
        %v491 = vsub.s32 0, %v490
        %v492 = vrot.slane %v487, %v491
        %v494 = vld [vmem:[%s339] sm:$0xff]
        %v495 = vld [vmem:[%s339 + $0x8] sm:$0xff]
        %v496 = vld [vmem:[%s339 + $0x18] sm:$0xff]
        %v497 = vld [vmem:[%s339 + $0x20] sm:$0xff]
        %v498 = vld [vmem:[%s339 + $0x30] sm:$0xff]
        %v499 = vld [vmem:[%s339 + $0x38] sm:$0xff]
        %v500 = vld [vmem:[%s339 + $0x48] sm:$0xff]
        %v501 = vld [vmem:[%s339 + $0x50] sm:$0xff]
        %v502 = vld [vmem:[%s339 + $0x60] sm:$0xff]
        %v503 = vld [vmem:[%s339 + $0x68] sm:$0xff]
        %v504 = vld [vmem:[%s339 + $0x78] sm:$0xff]
        %v505 = vld [vmem:[%s339 + $0x80] sm:$0xff]
        %v506 = vld [vmem:[%s339 + $0x90] sm:$0xff]
        %v507 = vld [vmem:[%s339 + $0x98] sm:$0xff]
        %v508 = vld [vmem:[%s339 + $0xa8] sm:$0xff]
        %v509 = vld [vmem:[%s339 + $0xb0] sm:$0xff]
        %v510 = vld [vmem:[%s1] sm:$0x1]
        %v511 = vlaneseq
        %v512 = vshrl.u32 %v511, 7
        %v513 = vsub.s32 0, %v512
        %v514 = vrot.slane %v510, %v513
        %v515 = vmul.f32 %v494, %v514
        %v516 = vmul.f32 %v495, %v514
        %v517 = vmul.f32 %v496, %v514
        %v518 = vmul.f32 %v497, %v514
        %v519 = vmul.f32 %v498, %v514
        %v520 = vmul.f32 %v499, %v514
        %v521 = vmul.f32 %v500, %v514
        %v522 = vmul.f32 %v501, %v514
        %v523 = vmul.f32 %v502, %v514
        %v524 = vmul.f32 %v503, %v514
        %v525 = vmul.f32 %v504, %v514
        %v526 = vmul.f32 %v505, %v514
        %v527 = vmul.f32 %v506, %v514
        %v528 = vmul.f32 %v507, %v514
        %v529 = vmul.f32 %v508, %v514
        %v530 = vmul.f32 %v509, %v514
        %v531 = vadd.f32 %v492, %v515
        %v532 = vadd.f32 %v492, %v516
        %v533 = vadd.f32 %v492, %v517
        %v534 = vadd.f32 %v492, %v518
        %v535 = vadd.f32 %v492, %v519
        %v536 = vadd.f32 %v492, %v520
        %v537 = vadd.f32 %v492, %v521
        %v538 = vadd.f32 %v492, %v522
        %v539 = vadd.f32 %v492, %v523
        %v540 = vadd.f32 %v492, %v524
        %v541 = vadd.f32 %v492, %v525
        %v542 = vadd.f32 %v492, %v526
        %v543 = vadd.f32 %v492, %v527
        %v544 = vadd.f32 %v492, %v528
        %v545 = vadd.f32 %v492, %v529
        %v546 = vadd.f32 %v492, %v530
        %v547 = vld [vmem:[%s339 + $0x1] sm:$0xff]
        %v548 = vld [vmem:[%s339 + $0x9] sm:$0xff]
        %v549 = vld [vmem:[%s339 + $0x19] sm:$0xff]
        %v550 = vld [vmem:[%s339 + $0x21] sm:$0xff]
        %v551 = vld [vmem:[%s339 + $0x31] sm:$0xff]
        %v552 = vld [vmem:[%s339 + $0x39] sm:$0xff]
        %v553 = vld [vmem:[%s339 + $0x49] sm:$0xff]
        %v554 = vld [vmem:[%s339 + $0x51] sm:$0xff]
        %v555 = vld [vmem:[%s339 + $0x61] sm:$0xff]
        %v556 = vld [vmem:[%s339 + $0x69] sm:$0xff]
        %v557 = vld [vmem:[%s339 + $0x79] sm:$0xff]
        %v558 = vld [vmem:[%s339 + $0x81] sm:$0xff]
        %v559 = vld [vmem:[%s339 + $0x91] sm:$0xff]
        %v560 = vld [vmem:[%s339 + $0x99] sm:$0xff]
        %v561 = vld [vmem:[%s339 + $0xa9] sm:$0xff]
        %v562 = vld [vmem:[%s339 + $0xb1] sm:$0xff]
        %v563 = vld [vmem:[%s1 + $0x1] sm:$0x1]
        %v564 = vlaneseq
        %v565 = vshrl.u32 %v564, 7
        %v566 = vsub.s32 0, %v565
        %v567 = vrot.slane %v563, %v566
        %v568 = vmul.f32 %v547, %v567
        %v569 = vmul.f32 %v548, %v567
        %v570 = vmul.f32 %v549, %v567
        %v571 = vmul.f32 %v550, %v567
        %v572 = vmul.f32 %v551, %v567
        %v573 = vmul.f32 %v552, %v567
        %v574 = vmul.f32 %v553, %v567
        %v575 = vmul.f32 %v554, %v567
        %v576 = vmul.f32 %v555, %v567
        %v577 = vmul.f32 %v556, %v567
        %v578 = vmul.f32 %v557, %v567
        %v579 = vmul.f32 %v558, %v567
        %v580 = vmul.f32 %v559, %v567
        %v581 = vmul.f32 %v560, %v567
        %v582 = vmul.f32 %v561, %v567
        %v583 = vmul.f32 %v562, %v567
        %v584 = vadd.f32 %v531, %v568
        %v585 = vadd.f32 %v532, %v569
        %v586 = vadd.f32 %v533, %v570
        %v587 = vadd.f32 %v534, %v571
        %v588 = vadd.f32 %v535, %v572
        %v589 = vadd.f32 %v536, %v573
        %v590 = vadd.f32 %v537, %v574
        %v591 = vadd.f32 %v538, %v575
        %v592 = vadd.f32 %v539, %v576
        %v593 = vadd.f32 %v540, %v577
        %v594 = vadd.f32 %v541, %v578
        %v595 = vadd.f32 %v542, %v579
        %v596 = vadd.f32 %v543, %v580
        %v597 = vadd.f32 %v544, %v581
        %v598 = vadd.f32 %v545, %v582
        %v599 = vadd.f32 %v546, %v583
        %v600 = vld [vmem:[%s339 + $0x2] sm:$0xff]
        %v601 = vld [vmem:[%s339 + $0xa] sm:$0xff]
        %v602 = vld [vmem:[%s339 + $0x1a] sm:$0xff]
        %v603 = vld [vmem:[%s339 + $0x22] sm:$0xff]
        %v604 = vld [vmem:[%s339 + $0x32] sm:$0xff]
        %v605 = vld [vmem:[%s339 + $0x3a] sm:$0xff]
        %v606 = vld [vmem:[%s339 + $0x4a] sm:$0xff]
        %v607 = vld [vmem:[%s339 + $0x52] sm:$0xff]
        %v608 = vld [vmem:[%s339 + $0x62] sm:$0xff]
        %v609 = vld [vmem:[%s339 + $0x6a] sm:$0xff]
        %v610 = vld [vmem:[%s339 + $0x7a] sm:$0xff]
        %v611 = vld [vmem:[%s339 + $0x82] sm:$0xff]
        %v612 = vld [vmem:[%s339 + $0x92] sm:$0xff]
        %v613 = vld [vmem:[%s339 + $0x9a] sm:$0xff]
        %v614 = vld [vmem:[%s339 + $0xaa] sm:$0xff]
        %v615 = vld [vmem:[%s339 + $0xb2] sm:$0xff]
        %v616 = vld [vmem:[%s1 + $0x2] sm:$0x1]
        %v617 = vlaneseq
        %v618 = vshrl.u32 %v617, 7
        %v619 = vsub.s32 0, %v618
        %v620 = vrot.slane %v616, %v619
        %v621 = vmul.f32 %v600, %v620
        %v622 = vmul.f32 %v601, %v620
        %v623 = vmul.f32 %v602, %v620
        %v624 = vmul.f32 %v603, %v620
        %v625 = vmul.f32 %v604, %v620
        %v626 = vmul.f32 %v605, %v620
        %v627 = vmul.f32 %v606, %v620
        %v628 = vmul.f32 %v607, %v620
        %v629 = vmul.f32 %v608, %v620
        %v630 = vmul.f32 %v609, %v620
        %v631 = vmul.f32 %v610, %v620
        %v632 = vmul.f32 %v611, %v620
        %v633 = vmul.f32 %v612, %v620
        %v634 = vmul.f32 %v613, %v620
        %v635 = vmul.f32 %v614, %v620
        %v636 = vmul.f32 %v615, %v620
        %v637 = vadd.f32 %v584, %v621
        %v638 = vadd.f32 %v585, %v622
        %v639 = vadd.f32 %v586, %v623
        %v640 = vadd.f32 %v587, %v624
        %v641 = vadd.f32 %v588, %v625
        %v642 = vadd.f32 %v589, %v626
        %v643 = vadd.f32 %v590, %v627
        %v644 = vadd.f32 %v591, %v628
        %v645 = vadd.f32 %v592, %v629
        %v646 = vadd.f32 %v593, %v630
        %v647 = vadd.f32 %v594, %v631
        %v648 = vadd.f32 %v595, %v632
        %v649 = vadd.f32 %v596, %v633
        %v650 = vadd.f32 %v597, %v634
        %v651 = vadd.f32 %v598, %v635
        %v652 = vadd.f32 %v599, %v636
        %s653 = scalar_lea.vmem %s339, 24 [#allocation2]
        %v654 = vld [vmem:[%s653] sm:$0xff]
        %v655 = vld [vmem:[%s653 + $0x8] sm:$0xff]
        %v656 = vld [vmem:[%s653 + $0x18] sm:$0xff]
        %v657 = vld [vmem:[%s653 + $0x20] sm:$0xff]
        %v658 = vld [vmem:[%s653 + $0x30] sm:$0xff]
        %v659 = vld [vmem:[%s653 + $0x38] sm:$0xff]
        %v660 = vld [vmem:[%s653 + $0x48] sm:$0xff]
        %v661 = vld [vmem:[%s653 + $0x50] sm:$0xff]
        %v662 = vld [vmem:[%s653 + $0x60] sm:$0xff]
        %v663 = vld [vmem:[%s653 + $0x68] sm:$0xff]
        %v664 = vld [vmem:[%s653 + $0x78] sm:$0xff]
        %v665 = vld [vmem:[%s653 + $0x80] sm:$0xff]
        %v666 = vld [vmem:[%s653 + $0x90] sm:$0xff]
        %v667 = vld [vmem:[%s653 + $0x98] sm:$0xff]
        %v668 = vld [vmem:[%s653 + $0xa8] sm:$0xff]
        %v669 = vld [vmem:[%s653 + $0xb0] sm:$0xff]
        %s670 = scalar_lea.vmem %s1, 4
        %v671 = vld [vmem:[%s670] sm:$0x1]
        %v672 = vlaneseq
        %v673 = vshrl.u32 %v672, 7
        %v674 = vsub.s32 0, %v673
        %v675 = vrot.slane %v671, %v674
        %v676 = vmul.f32 %v654, %v675
        %v677 = vmul.f32 %v655, %v675
        %v678 = vmul.f32 %v656, %v675
        %v679 = vmul.f32 %v657, %v675
        %v680 = vmul.f32 %v658, %v675
        %v681 = vmul.f32 %v659, %v675
        %v682 = vmul.f32 %v660, %v675
        %v683 = vmul.f32 %v661, %v675
        %v684 = vmul.f32 %v662, %v675
        %v685 = vmul.f32 %v663, %v675
        %v686 = vmul.f32 %v664, %v675
        %v687 = vmul.f32 %v665, %v675
        %v688 = vmul.f32 %v666, %v675
        %v689 = vmul.f32 %v667, %v675
        %v690 = vmul.f32 %v668, %v675
        %v691 = vmul.f32 %v669, %v675
        %v692 = vadd.f32 %v637, %v676
        %v693 = vadd.f32 %v638, %v677
        %v694 = vadd.f32 %v639, %v678
        %v695 = vadd.f32 %v640, %v679
        %v696 = vadd.f32 %v641, %v680
        %v697 = vadd.f32 %v642, %v681
        %v698 = vadd.f32 %v643, %v682
        %v699 = vadd.f32 %v644, %v683
        %v700 = vadd.f32 %v645, %v684
        %v701 = vadd.f32 %v646, %v685
        %v702 = vadd.f32 %v647, %v686
        %v703 = vadd.f32 %v648, %v687
        %v704 = vadd.f32 %v649, %v688
        %v705 = vadd.f32 %v650, %v689
        %v706 = vadd.f32 %v651, %v690
        %v707 = vadd.f32 %v652, %v691
        %v708 = vld [vmem:[%s653 + $0x1] sm:$0xff]
        %v709 = vld [vmem:[%s653 + $0x9] sm:$0xff]
        %v710 = vld [vmem:[%s653 + $0x19] sm:$0xff]
        %v711 = vld [vmem:[%s653 + $0x21] sm:$0xff]
        %v712 = vld [vmem:[%s653 + $0x31] sm:$0xff]
        %v713 = vld [vmem:[%s653 + $0x39] sm:$0xff]
        %v714 = vld [vmem:[%s653 + $0x49] sm:$0xff]
        %v715 = vld [vmem:[%s653 + $0x51] sm:$0xff]
        %v716 = vld [vmem:[%s653 + $0x61] sm:$0xff]
        %v717 = vld [vmem:[%s653 + $0x69] sm:$0xff]
        %v718 = vld [vmem:[%s653 + $0x79] sm:$0xff]
        %v719 = vld [vmem:[%s653 + $0x81] sm:$0xff]
        %v720 = vld [vmem:[%s653 + $0x91] sm:$0xff]
        %v721 = vld [vmem:[%s653 + $0x99] sm:$0xff]
        %v722 = vld [vmem:[%s653 + $0xa9] sm:$0xff]
        %v723 = vld [vmem:[%s653 + $0xb1] sm:$0xff]
        %v724 = vld [vmem:[%s670 + $0x1] sm:$0x1]
        %v725 = vlaneseq
        %v726 = vshrl.u32 %v725, 7
        %v727 = vsub.s32 0, %v726
        %v728 = vrot.slane %v724, %v727
        %v729 = vmul.f32 %v708, %v728
        %v730 = vmul.f32 %v709, %v728
        %v731 = vmul.f32 %v710, %v728
        %v732 = vmul.f32 %v711, %v728
        %v733 = vmul.f32 %v712, %v728
        %v734 = vmul.f32 %v713, %v728
        %v735 = vmul.f32 %v714, %v728
        %v736 = vmul.f32 %v715, %v728
        %v737 = vmul.f32 %v716, %v728
        %v738 = vmul.f32 %v717, %v728
        %v739 = vmul.f32 %v718, %v728
        %v740 = vmul.f32 %v719, %v728
        %v741 = vmul.f32 %v720, %v728
        %v742 = vmul.f32 %v721, %v728
        %v743 = vmul.f32 %v722, %v728
        %v744 = vmul.f32 %v723, %v728
        %v745 = vadd.f32 %v692, %v729
        %v746 = vadd.f32 %v693, %v730
        %v747 = vadd.f32 %v694, %v731
        %v748 = vadd.f32 %v695, %v732
        %v749 = vadd.f32 %v696, %v733
        %v750 = vadd.f32 %v697, %v734
        %v751 = vadd.f32 %v698, %v735
        %v752 = vadd.f32 %v699, %v736
        %v753 = vadd.f32 %v700, %v737
        %v754 = vadd.f32 %v701, %v738
        %v755 = vadd.f32 %v702, %v739
        %v756 = vadd.f32 %v703, %v740
        %v757 = vadd.f32 %v704, %v741
        %v758 = vadd.f32 %v705, %v742
        %v759 = vadd.f32 %v706, %v743
        %v760 = vadd.f32 %v707, %v744
        %v761 = vld [vmem:[%s653 + $0x2] sm:$0xff]
        %v762 = vld [vmem:[%s653 + $0xa] sm:$0xff]
        %v763 = vld [vmem:[%s653 + $0x1a] sm:$0xff]
        %v764 = vld [vmem:[%s653 + $0x22] sm:$0xff]
        %v765 = vld [vmem:[%s653 + $0x32] sm:$0xff]
        %v766 = vld [vmem:[%s653 + $0x3a] sm:$0xff]
        %v767 = vld [vmem:[%s653 + $0x4a] sm:$0xff]
        %v768 = vld [vmem:[%s653 + $0x52] sm:$0xff]
        %v769 = vld [vmem:[%s653 + $0x62] sm:$0xff]
        %v770 = vld [vmem:[%s653 + $0x6a] sm:$0xff]
        %v771 = vld [vmem:[%s653 + $0x7a] sm:$0xff]
        %v772 = vld [vmem:[%s653 + $0x82] sm:$0xff]
        %v773 = vld [vmem:[%s653 + $0x92] sm:$0xff]
        %v774 = vld [vmem:[%s653 + $0x9a] sm:$0xff]
        %v775 = vld [vmem:[%s653 + $0xaa] sm:$0xff]
        %v776 = vld [vmem:[%s653 + $0xb2] sm:$0xff]
        %v777 = vld [vmem:[%s670 + $0x2] sm:$0x1]
        %v778 = vlaneseq
        %v779 = vshrl.u32 %v778, 7
        %v780 = vsub.s32 0, %v779
        %v781 = vrot.slane %v777, %v780
        %v782 = vmul.f32 %v761, %v781
        %v783 = vmul.f32 %v762, %v781
        %v784 = vmul.f32 %v763, %v781
        %v785 = vmul.f32 %v764, %v781
        %v786 = vmul.f32 %v765, %v781
        %v787 = vmul.f32 %v766, %v781
        %v788 = vmul.f32 %v767, %v781
        %v789 = vmul.f32 %v768, %v781
        %v790 = vmul.f32 %v769, %v781
        %v791 = vmul.f32 %v770, %v781
        %v792 = vmul.f32 %v771, %v781
        %v793 = vmul.f32 %v772, %v781
        %v794 = vmul.f32 %v773, %v781
        %v795 = vmul.f32 %v774, %v781
        %v796 = vmul.f32 %v775, %v781
        %v797 = vmul.f32 %v776, %v781
        %v798 = vadd.f32 %v745, %v782
        %v799 = vadd.f32 %v746, %v783
        %v800 = vadd.f32 %v747, %v784
        %v801 = vadd.f32 %v748, %v785
        %v802 = vadd.f32 %v749, %v786
        %v803 = vadd.f32 %v750, %v787
        %v804 = vadd.f32 %v751, %v788
        %v805 = vadd.f32 %v752, %v789
        %v806 = vadd.f32 %v753, %v790
        %v807 = vadd.f32 %v754, %v791
        %v808 = vadd.f32 %v755, %v792
        %v809 = vadd.f32 %v756, %v793
        %v810 = vadd.f32 %v757, %v794
        %v811 = vadd.f32 %v758, %v795
        %v812 = vadd.f32 %v759, %v796
        %v813 = vadd.f32 %v760, %v797
        %s814 = scalar_lea.vmem %s339, 48 [#allocation2]
        %v815 = vld [vmem:[%s814] sm:$0xff]
        %v816 = vld [vmem:[%s814 + $0x8] sm:$0xff]
        %v817 = vld [vmem:[%s814 + $0x18] sm:$0xff]
        %v818 = vld [vmem:[%s814 + $0x20] sm:$0xff]
        %v819 = vld [vmem:[%s814 + $0x30] sm:$0xff]
        %v820 = vld [vmem:[%s814 + $0x38] sm:$0xff]
        %v821 = vld [vmem:[%s814 + $0x48] sm:$0xff]
        %v822 = vld [vmem:[%s814 + $0x50] sm:$0xff]
        %v823 = vld [vmem:[%s814 + $0x60] sm:$0xff]
        %v824 = vld [vmem:[%s814 + $0x68] sm:$0xff]
        %v825 = vld [vmem:[%s814 + $0x78] sm:$0xff]
        %v826 = vld [vmem:[%s814 + $0x80] sm:$0xff]
        %v827 = vld [vmem:[%s814 + $0x90] sm:$0xff]
        %v828 = vld [vmem:[%s814 + $0x98] sm:$0xff]
        %v829 = vld [vmem:[%s814 + $0xa8] sm:$0xff]
        %v830 = vld [vmem:[%s814 + $0xb0] sm:$0xff]
        %s831 = scalar_lea.vmem %s1, 8
        %v832 = vld [vmem:[%s831] sm:$0x1]
        %v833 = vlaneseq
        %v834 = vshrl.u32 %v833, 7
        %v835 = vsub.s32 0, %v834
        %v836 = vrot.slane %v832, %v835
        %v837 = vmul.f32 %v815, %v836
        %v838 = vmul.f32 %v816, %v836
        %v839 = vmul.f32 %v817, %v836
        %v840 = vmul.f32 %v818, %v836
        %v841 = vmul.f32 %v819, %v836
        %v842 = vmul.f32 %v820, %v836
        %v843 = vmul.f32 %v821, %v836
        %v844 = vmul.f32 %v822, %v836
        %v845 = vmul.f32 %v823, %v836
        %v846 = vmul.f32 %v824, %v836
        %v847 = vmul.f32 %v825, %v836
        %v848 = vmul.f32 %v826, %v836
        %v849 = vmul.f32 %v827, %v836
        %v850 = vmul.f32 %v828, %v836
        %v851 = vmul.f32 %v829, %v836
        %v852 = vmul.f32 %v830, %v836
        %v853 = vadd.f32 %v798, %v837
        %v854 = vadd.f32 %v799, %v838
        %v855 = vadd.f32 %v800, %v839
        %v856 = vadd.f32 %v801, %v840
        %v857 = vadd.f32 %v802, %v841
        %v858 = vadd.f32 %v803, %v842
        %v859 = vadd.f32 %v804, %v843
        %v860 = vadd.f32 %v805, %v844
        %v861 = vadd.f32 %v806, %v845
        %v862 = vadd.f32 %v807, %v846
        %v863 = vadd.f32 %v808, %v847
        %v864 = vadd.f32 %v809, %v848
        %v865 = vadd.f32 %v810, %v849
        %v866 = vadd.f32 %v811, %v850
        %v867 = vadd.f32 %v812, %v851
        %v868 = vadd.f32 %v813, %v852
        %v869 = vld [vmem:[%s814 + $0x1] sm:$0xff]
        %v870 = vld [vmem:[%s814 + $0x9] sm:$0xff]
        %v871 = vld [vmem:[%s814 + $0x19] sm:$0xff]
        %v872 = vld [vmem:[%s814 + $0x21] sm:$0xff]
        %v873 = vld [vmem:[%s814 + $0x31] sm:$0xff]
        %v874 = vld [vmem:[%s814 + $0x39] sm:$0xff]
        %v875 = vld [vmem:[%s814 + $0x49] sm:$0xff]
        %v876 = vld [vmem:[%s814 + $0x51] sm:$0xff]
        %v877 = vld [vmem:[%s814 + $0x61] sm:$0xff]
        %v878 = vld [vmem:[%s814 + $0x69] sm:$0xff]
        %v879 = vld [vmem:[%s814 + $0x79] sm:$0xff]
        %v880 = vld [vmem:[%s814 + $0x81] sm:$0xff]
        %v881 = vld [vmem:[%s814 + $0x91] sm:$0xff]
        %v882 = vld [vmem:[%s814 + $0x99] sm:$0xff]
        %v883 = vld [vmem:[%s814 + $0xa9] sm:$0xff]
        %v884 = vld [vmem:[%s814 + $0xb1] sm:$0xff]
        %v885 = vld [vmem:[%s831 + $0x1] sm:$0x1]
        %v886 = vlaneseq
        %v887 = vshrl.u32 %v886, 7
        %v888 = vsub.s32 0, %v887
        %v889 = vrot.slane %v885, %v888
        %v890 = vmul.f32 %v869, %v889
        %v891 = vmul.f32 %v870, %v889
        %v892 = vmul.f32 %v871, %v889
        %v893 = vmul.f32 %v872, %v889
        %v894 = vmul.f32 %v873, %v889
        %v895 = vmul.f32 %v874, %v889
        %v896 = vmul.f32 %v875, %v889
        %v897 = vmul.f32 %v876, %v889
        %v898 = vmul.f32 %v877, %v889
        %v899 = vmul.f32 %v878, %v889
        %v900 = vmul.f32 %v879, %v889
        %v901 = vmul.f32 %v880, %v889
        %v902 = vmul.f32 %v881, %v889
        %v903 = vmul.f32 %v882, %v889
        %v904 = vmul.f32 %v883, %v889
        %v905 = vmul.f32 %v884, %v889
        %v906 = vadd.f32 %v853, %v890
        %v907 = vadd.f32 %v854, %v891
        %v908 = vadd.f32 %v855, %v892
        %v909 = vadd.f32 %v856, %v893
        %v910 = vadd.f32 %v857, %v894
        %v911 = vadd.f32 %v858, %v895
        %v912 = vadd.f32 %v859, %v896
        %v913 = vadd.f32 %v860, %v897
        %v914 = vadd.f32 %v861, %v898
        %v915 = vadd.f32 %v862, %v899
        %v916 = vadd.f32 %v863, %v900
        %v917 = vadd.f32 %v864, %v901
        %v918 = vadd.f32 %v865, %v902
        %v919 = vadd.f32 %v866, %v903
        %v920 = vadd.f32 %v867, %v904
        %v921 = vadd.f32 %v868, %v905
        %v922 = vld [vmem:[%s814 + $0x2] sm:$0xff]
        %v923 = vld [vmem:[%s814 + $0xa] sm:$0xff]
        %v924 = vld [vmem:[%s814 + $0x1a] sm:$0xff]
        %v925 = vld [vmem:[%s814 + $0x22] sm:$0xff]
        %v926 = vld [vmem:[%s814 + $0x32] sm:$0xff]
        %v927 = vld [vmem:[%s814 + $0x3a] sm:$0xff]
        %v928 = vld [vmem:[%s814 + $0x4a] sm:$0xff]
        %v929 = vld [vmem:[%s814 + $0x52] sm:$0xff]
        %v930 = vld [vmem:[%s814 + $0x62] sm:$0xff]
        %v931 = vld [vmem:[%s814 + $0x6a] sm:$0xff]
        %v932 = vld [vmem:[%s814 + $0x7a] sm:$0xff]
        %v933 = vld [vmem:[%s814 + $0x82] sm:$0xff]
        %v934 = vld [vmem:[%s814 + $0x92] sm:$0xff]
        %v935 = vld [vmem:[%s814 + $0x9a] sm:$0xff]
        %v936 = vld [vmem:[%s814 + $0xaa] sm:$0xff]
        %v937 = vld [vmem:[%s814 + $0xb2] sm:$0xff]
        %v938 = vld [vmem:[%s831 + $0x2] sm:$0x1]
        %v939 = vlaneseq
        %v940 = vshrl.u32 %v939, 7
        %v941 = vsub.s32 0, %v940
        %v942 = vrot.slane %v938, %v941
        %v943 = vmul.f32 %v922, %v942
        %v944 = vmul.f32 %v923, %v942
        %v945 = vmul.f32 %v924, %v942
        %v946 = vmul.f32 %v925, %v942
        %v947 = vmul.f32 %v926, %v942
        %v948 = vmul.f32 %v927, %v942
        %v949 = vmul.f32 %v928, %v942
        %v950 = vmul.f32 %v929, %v942
        %v951 = vmul.f32 %v930, %v942
        %v952 = vmul.f32 %v931, %v942
        %v953 = vmul.f32 %v932, %v942
        %v954 = vmul.f32 %v933, %v942
        %v955 = vmul.f32 %v934, %v942
        %v956 = vmul.f32 %v935, %v942
        %v957 = vmul.f32 %v936, %v942
        %v958 = vmul.f32 %v937, %v942
        %v959 = vadd.f32 %v906, %v943
        %v960 = vadd.f32 %v907, %v944
        %v961 = vadd.f32 %v908, %v945
        %v962 = vadd.f32 %v909, %v946
        %v963 = vadd.f32 %v910, %v947
        %v964 = vadd.f32 %v911, %v948
        %v965 = vadd.f32 %v912, %v949
        %v966 = vadd.f32 %v913, %v950
        %v967 = vadd.f32 %v914, %v951
        %v968 = vadd.f32 %v915, %v952
        %v969 = vadd.f32 %v916, %v953
        %v970 = vadd.f32 %v917, %v954
        %v971 = vadd.f32 %v918, %v955
        %v972 = vadd.f32 %v919, %v956
        %v973 = vadd.f32 %v920, %v957
        %v974 = vadd.f32 %v921, %v958
        %v975 = vmax.f32 %v959, 0.0
        %v976 = vmax.f32 %v960, 0.0
        %v977 = vmax.f32 %v961, 0.0
        %v978 = vmax.f32 %v962, 0.0
        %v979 = vmax.f32 %v963, 0.0
        %v980 = vmax.f32 %v964, 0.0
        %v981 = vmax.f32 %v965, 0.0
        %v982 = vmax.f32 %v966, 0.0
        %v983 = vmax.f32 %v967, 0.0
        %v984 = vmax.f32 %v968, 0.0
        %v985 = vmax.f32 %v969, 0.0
        %v986 = vmax.f32 %v970, 0.0
        %v987 = vmax.f32 %v971, 0.0
        %v988 = vmax.f32 %v972, 0.0
        %v989 = vmax.f32 %v973, 0.0
        %v990 = vmax.f32 %v974, 0.0
        %v991 = vld [vmem:[%s3] sm:$0xff]
        %v992 = vld [vmem:[%s3 + $0x8] sm:$0xff]
        %v993 = vld [vmem:[%s3 + $0x10] sm:$0xff]
        %v994 = vld [vmem:[%s3 + $0x18] sm:$0xff]
        %v995 = vld [vmem:[%s3 + $0x20] sm:$0xff]
        %v996 = vld [vmem:[%s3 + $0x28] sm:$0xff]
        %v997 = vld [vmem:[%s3 + $0x30] sm:$0xff]
        %v998 = vld [vmem:[%s3 + $0x38] sm:$0xff]
        %v999 = vld [vmem:[%s3 + $0x40] sm:$0xff]
        %v1000 = vld [vmem:[%s3 + $0x48] sm:$0xff]
        %v1001 = vld [vmem:[%s3 + $0x50] sm:$0xff]
        %v1002 = vld [vmem:[%s3 + $0x58] sm:$0xff]
        %v1003 = vld [vmem:[%s3 + $0x60] sm:$0xff]
        %v1004 = vld [vmem:[%s3 + $0x68] sm:$0xff]
        %v1005 = vld [vmem:[%s3 + $0x70] sm:$0xff]
        %v1006 = vld [vmem:[%s3 + $0x78] sm:$0xff]
        %v1007 = vld [vmem:[%s4] sm:$0x1]
        %v1009 = vlaneseq
        %v1010 = vshrl.u32 %v1009, 7
        %v1011 = vsub.s32 0, %v1010
        %v1012 = vrot.slane %v1007, %v1011
        %1014 = vmatprep.subr.mxu0 0.0
        %1015 = vmatpush1.msra.mxu0 %v991
        %1016 = vmatprep.subr.mxu0 0.0
        %1017 = vmatpush1.msra.mxu0 %v992
        %1018 = vmatprep.subr.mxu0 0.0
        %1019 = vmatpush1.msra.mxu0 %v993
        %1020 = vmatprep.subr.mxu0 0.0
        %1021 = vmatpush1.msra.mxu0 %v994
        %1022 = vmatprep.subr.mxu0 0.0
        %1023 = vmatpush1.msra.mxu0 %v995
        %1024 = vmatprep.subr.mxu0 0.0
        %1025 = vmatpush1.msra.mxu0 %v996
        %1026 = vmatprep.subr.mxu0 0.0
        %1027 = vmatpush1.msra.mxu0 %v997
        %1028 = vmatprep.subr.mxu0 0.0
        %1029 = vmatpush1.msra.mxu0 %v998
        %1030 = vmatprep.subr.mxu0 0.0
        %1031 = vmatpush1.msra.mxu0 %v999
        %1032 = vmatprep.subr.mxu0 0.0
        %1033 = vmatpush1.msra.mxu0 %v1000
        %1034 = vmatprep.subr.mxu0 0.0
        %1035 = vmatpush1.msra.mxu0 %v1001
        %1036 = vmatprep.subr.mxu0 0.0
        %1037 = vmatpush1.msra.mxu0 %v1002
        %1038 = vmatprep.subr.mxu0 0.0
        %1039 = vmatpush1.msra.mxu0 %v1003
        %1040 = vmatprep.subr.mxu0 0.0
        %1041 = vmatpush1.msra.mxu0 %v1004
        %1042 = vmatprep.subr.mxu0 0.0
        %1043 = vmatpush1.msra.mxu0 %v1005
        %1044 = vmatprep.subr.mxu0 0.0
        %1045 = vmatpush1.msra.mxu0 %v1006
        %1046 = vmatprep.subr.mxu0 0.0
        %1047 = vmatpush1.msra.mxu0 0.0
        %1048 = vmatprep.subr.mxu0 0.0
        %1049 = vmatpush1.msra.mxu0 0.0
        %1050 = vmatprep.subr.mxu0 0.0
        %1051 = vmatpush1.msra.mxu0 0.0
        %1052 = vmatprep.subr.mxu0 0.0
        %1053 = vmatpush1.msra.mxu0 0.0
        %1054 = vmatprep.subr.mxu0 0.0
        %1055 = vmatpush1.msra.mxu0 0.0
        %1056 = vmatprep.subr.mxu0 0.0
        %1057 = vmatpush1.msra.mxu0 0.0
        %1058 = vmatprep.subr.mxu0 0.0
        %1059 = vmatpush1.msra.mxu0 0.0
        %1060 = vmatprep.subr.mxu0 0.0
        %1061 = vmatpush1.msra.mxu0 0.0
        %1062 = vmatprep.subr.mxu0 0.0
        %1063 = vmatpush1.msra.mxu0 0.0
        %1064 = vmatprep.subr.mxu0 0.0
        %1065 = vmatpush1.msra.mxu0 0.0
        %1066 = vmatprep.subr.mxu0 0.0
        %1067 = vmatpush1.msra.mxu0 0.0
        %1068 = vmatprep.subr.mxu0 0.0
        %1069 = vmatpush1.msra.mxu0 0.0
        %1070 = vmatprep.subr.mxu0 0.0
        %1071 = vmatpush1.msra.mxu0 0.0
        %1072 = vmatprep.subr.mxu0 0.0
        %1073 = vmatpush1.msra.mxu0 0.0
        %1074 = vmatprep.subr.mxu0 0.0
        %1075 = vmatpush1.msra.mxu0 0.0
        %1076 = vmatprep.subr.mxu0 0.0
        %1077 = vmatpush1.msra.mxu0 0.0
        %1078 = vmatprep.mubr.f32.mxu0 0.0
        %1079 = vmatmul.mubr.f32.gmra.mrb[0].mxu0 %v975
        %v1080 = vpop.f32.mrb[0].mxu0
        %v1081 = vadd.f32 %v1012, %v1080
        %v1082 = vpop.f32.mrb[0].mxu0
        %1083 = vmatprep.mubr.f32.mxu0 0.0
        %1084 = vmatmul.mubr.f32.gmra.mrb[0].mxu0 %v976
        %v1085 = vpop.f32.mrb[0].mxu0
        %v1086 = vadd.f32 %v1012, %v1085
        %v1087 = vpop.f32.mrb[0].mxu0
        %1088 = vmatprep.mubr.f32.mxu0 0.0
        %1089 = vmatmul.mubr.f32.gmra.mrb[0].mxu0 %v977
        %v1090 = vpop.f32.mrb[0].mxu0
        %v1091 = vadd.f32 %v1012, %v1090
        %v1092 = vpop.f32.mrb[0].mxu0
        %1093 = vmatprep.mubr.f32.mxu0 0.0
        %1094 = vmatmul.mubr.f32.gmra.mrb[0].mxu0 %v978
        %v1095 = vpop.f32.mrb[0].mxu0
        %v1096 = vadd.f32 %v1012, %v1095
        %v1097 = vpop.f32.mrb[0].mxu0
        %1098 = vmatprep.mubr.f32.mxu0 0.0
        %1099 = vmatmul.mubr.f32.gmra.mrb[0].mxu0 %v979
        %v1100 = vpop.f32.mrb[0].mxu0
        %v1101 = vadd.f32 %v1012, %v1100
        %v1102 = vpop.f32.mrb[0].mxu0
        %1103 = vmatprep.mubr.f32.mxu0 0.0
        %1104 = vmatmul.mubr.f32.gmra.mrb[0].mxu0 %v980
        %v1105 = vpop.f32.mrb[0].mxu0
        %v1106 = vadd.f32 %v1012, %v1105
        %v1107 = vpop.f32.mrb[0].mxu0
        %1108 = vmatprep.mubr.f32.mxu0 0.0
        %1109 = vmatmul.mubr.f32.gmra.mrb[0].mxu0 %v981
        %v1110 = vpop.f32.mrb[0].mxu0
        %v1111 = vadd.f32 %v1012, %v1110
        %v1112 = vpop.f32.mrb[0].mxu0
        %1113 = vmatprep.mubr.f32.mxu0 0.0
        %1114 = vmatmul.mubr.f32.gmra.mrb[0].mxu0 %v982
        %v1115 = vpop.f32.mrb[0].mxu0
        %v1116 = vadd.f32 %v1012, %v1115
        %v1117 = vpop.f32.mrb[0].mxu0
        %1118 = vmatprep.mubr.f32.mxu0 0.0
        %1119 = vmatmul.mubr.f32.gmra.mrb[0].mxu0 %v983
        %v1120 = vpop.f32.mrb[0].mxu0
        %v1121 = vadd.f32 %v1012, %v1120
        %v1122 = vpop.f32.mrb[0].mxu0
        %1123 = vmatprep.mubr.f32.mxu0 0.0
        %1124 = vmatmul.mubr.f32.gmra.mrb[0].mxu0 %v984
        %v1125 = vpop.f32.mrb[0].mxu0
        %v1126 = vadd.f32 %v1012, %v1125
        %v1127 = vpop.f32.mrb[0].mxu0
        %1128 = vmatprep.mubr.f32.mxu0 0.0
        %1129 = vmatmul.mubr.f32.gmra.mrb[0].mxu0 %v985
        %v1130 = vpop.f32.mrb[0].mxu0
        %v1131 = vadd.f32 %v1012, %v1130
        %v1132 = vpop.f32.mrb[0].mxu0
        %1133 = vmatprep.mubr.f32.mxu0 0.0
        %1134 = vmatmul.mubr.f32.gmra.mrb[0].mxu0 %v986
        %v1135 = vpop.f32.mrb[0].mxu0
        %v1136 = vadd.f32 %v1012, %v1135
        %v1137 = vpop.f32.mrb[0].mxu0
        %1138 = vmatprep.mubr.f32.mxu0 0.0
        %1139 = vmatmul.mubr.f32.gmra.mrb[0].mxu0 %v987
        %v1140 = vpop.f32.mrb[0].mxu0
        %v1141 = vadd.f32 %v1012, %v1140
        %v1142 = vpop.f32.mrb[0].mxu0
        %1143 = vmatprep.mubr.f32.mxu0 0.0
        %1144 = vmatmul.mubr.f32.gmra.mrb[0].mxu0 %v988
        %v1145 = vpop.f32.mrb[0].mxu0
        %v1146 = vadd.f32 %v1012, %v1145
        %v1147 = vpop.f32.mrb[0].mxu0
        %1148 = vmatprep.mubr.f32.mxu0 0.0
        %1149 = vmatmul.mubr.f32.gmra.mrb[0].mxu0 %v989
        %v1150 = vpop.f32.mrb[0].mxu0
        %v1151 = vadd.f32 %v1012, %v1150
        %v1152 = vpop.f32.mrb[0].mxu0
        %1153 = vmatprep.mubr.f32.mxu0 0.0
        %1154 = vmatmul.mubr.f32.gmra.mrb[0].mxu0 %v990
        %v1155 = vpop.f32.mrb[0].mxu0
        %v1156 = vadd.f32 %v1012, %v1155
        %v1157 = vpop.f32.mrb[0].mxu0
        %1158 = vdwg.mxu0
        %v1159 = vmax.f32 %v1081, 0.0
        %v1160 = vmax.f32 %v1086, 0.0
        %v1161 = vmax.f32 %v1091, 0.0
        %v1162 = vmax.f32 %v1096, 0.0
        %v1163 = vmax.f32 %v1101, 0.0
        %v1164 = vmax.f32 %v1106, 0.0
        %v1165 = vmax.f32 %v1111, 0.0
        %v1166 = vmax.f32 %v1116, 0.0
        %v1167 = vmax.f32 %v1121, 0.0
        %v1168 = vmax.f32 %v1126, 0.0
        %v1169 = vmax.f32 %v1131, 0.0
        %v1170 = vmax.f32 %v1136, 0.0
        %v1171 = vmax.f32 %v1141, 0.0
        %v1172 = vmax.f32 %v1146, 0.0
        %v1173 = vmax.f32 %v1151, 0.0
        %v1174 = vmax.f32 %v1156, 0.0
        %1175 = vst [vmem:[%s190] sm:$0xff] %v1159
        %1176 = vst [vmem:[%s190 + $0x8] sm:$0xff] %v1160
        %1177 = vst [vmem:[%s190 + $0x10] sm:$0xff] %v1161
        %1178 = vst [vmem:[%s190 + $0x18] sm:$0xff] %v1162
        %1179 = vst [vmem:[%s190 + $0x20] sm:$0xff] %v1163
        %1180 = vst [vmem:[%s190 + $0x28] sm:$0xff] %v1164
        %1181 = vst [vmem:[%s190 + $0x30] sm:$0xff] %v1165
        %1182 = vst [vmem:[%s190 + $0x38] sm:$0xff] %v1166
        %1183 = vst [vmem:[%s190 + $0x40] sm:$0xff] %v1167
        %1184 = vst [vmem:[%s190 + $0x48] sm:$0xff] %v1168
        %1185 = vst [vmem:[%s190 + $0x50] sm:$0xff] %v1169
        %1186 = vst [vmem:[%s190 + $0x58] sm:$0xff] %v1170
        %1187 = vst [vmem:[%s190 + $0x60] sm:$0xff] %v1171
        %1188 = vst [vmem:[%s190 + $0x68] sm:$0xff] %v1172
        %1189 = vst [vmem:[%s190 + $0x70] sm:$0xff] %v1173
        %1190 = vst [vmem:[%s190 + $0x78] sm:$0xff] %v1174
        %s1191 = sand.u32 %s125, 1
        %s1192 = scalar_lea.sflag [#allocation5], %s1191
        %s1193 = sand.u32 %s125, 1
        %s1194 = smul.addr %s1193, 128
        %s1195 = scalar_lea.vmem [#allocation4], %s1194
        // Predicated region
        $region119: #{tpu_custom_call.1} parent=35 // pred_check
          %p1196 = pneg %p135
        $region120: #{tpu_custom_call.1} parent=35 // pred_check_branch
          %1198 = sbr.rel (%p1196) target = $region122
        $region121: #{tpu_custom_call.1} parent=35 // pred_region
          %s1199 = smul.u32 8, %s24
          %s1201 = ssub.s32 2048, 2048
          %1202 = vsyncadd %s1192, %s1201
          %s1203 = smul.addr %s1199, 2
          %s1204 = smul.addr %s23, 32
          %s1205 = sadd.s32 %s1203, %s1204
          %s1206 = smul.addr %s1205, 128
          %s1207 = scalar_lea.hbm %s5, %s1206
          %s1208 = sshll.u32 %s1195, 4
          %s1209 = int_to_ptr.vmem [resolvable:$true] %s1208
          %1214 = dma.vmem_to_hbm [thread:$0]  %s1209, 2048, %s1207, %s1192, 128, 128, 8
        $region122: #{tpu_custom_call.1} parent=35 // pred_fallthru
          _
      $region36: #{tpu_custom_call.1} parent=5 // pred_fallthru
        _
      %p1215 = scmp.le.s32.totalorder 2, %s14
      // Predicated region
      $region123: #{tpu_custom_call.1} parent=5 // pred_check
        %p1216 = pneg %p1215
      $region124: #{tpu_custom_call.1} parent=5 // pred_check_branch
        %1218 = sbr.rel (%p1216) target = $region126
      $region125: #{tpu_custom_call.1} parent=5 // pred_region
        %s1219 = ssub.s32 %s14, 2
        // Predicated region
        $region127: #{tpu_custom_call.1} parent=125 // pred_check
          %p1220 = pneg %p141
        $region128: #{tpu_custom_call.1} parent=125 // pred_check_branch
          %1222 = sbr.rel (%p1220) target = $region130
        $region129: #{tpu_custom_call.1} parent=125 // pred_region
          %s1223 = sand.u32 %s126, 1
          %s1224 = scalar_lea.sflag [#allocation5], %s1223
          %s1225 = sand.u32 %s126, 1
          %s1226 = smul.addr %s1225, 128
          %s1227 = scalar_lea.vmem [#allocation4], %s1226
          %1228 = dma.done %s1224, 2048
        $region130: #{tpu_custom_call.1} parent=125 // pred_fallthru
          _
      $region126: #{tpu_custom_call.1} parent=5 // pred_fallthru
        _
    $region6: #{tpu_custom_call.1} parent=1 // loop_footer
      %s18 = sadd.s32 1, %s14
    $region7: #{tpu_custom_call.1} parent=1 // loop_footer_branch
      %13 = sbr.rel target = $region3
    $region8: #{tpu_custom_call.1} parent=1 // loop_exit
      _
    %1229 = vsyncpa [#allocation5], 1
    %s1230 = scalar_lea.sflag [#allocation5], 1
    %1231 = vsyncpa %s1230, 1
  %1232 = vsyncmov [#allocation3]
  %s1233 = vpop.sfrf %1232
  %p1234 = scmp.eq.s32.totalorder %s1233, 0
  %p1235 = pneg %p1234
  %1237 = shalt.err (%p1235)
  %s1238 = scalar_lea.sflag [#allocation3], 1
  %1239 = vsyncmov %s1238
  %s1240 = vpop.sfrf %1239
  %p1241 = scmp.eq.s32.totalorder %s1240, 0
  %p1242 = pneg %p1241
  %1244 = shalt.err (%p1242)

</llo_original>
